<compile_context>
chip_gen: v7x
topology: tpu7x:2x2x1
jax: 0.10.0
libtpu: 0.0.40
codegen_flags: <defaults>
</compile_context>

<pallas_src>
import functools
import math

import jax
import jax.numpy as jnp
from jax.experimental import pallas as pl
from jax.experimental.pallas import tpu as pltpu


# ------------------------------ Pallas kernel ------------------------------

def _ca_block_kernel(x_ref, w1_ref, b1_ref, wd_ref, wh_ref, ww_ref, o_ref,
                     *, h, w):
    _, d, hw, c = x_ref.shape          # block = (1, D, H*W, C), channels-last
    assert hw == h * w
    dh, dw = d * h, d * w

    # ---- coordinate pooling: single pass over the slab ----------------------
    xd_sum = jnp.zeros((hw, c), jnp.float32)
    xh_parts, xw_parts = [], []
    for di in range(d):                                   # static trip count
        sl = x_ref[0, di].astype(jnp.float32)             # (H*W, C)
        sl3 = sl.reshape(h, w, c)                         # aligned split (W%8==0)
        xd_sum = xd_sum + sl
        xh_parts.append(jnp.mean(sl3, axis=1))            # (H, C): mean over W
        xw_parts.append(jnp.mean(sl3, axis=0))            # (W, C): mean over H
    # Row order matches torch.cat((x_d, x_h, x_w), dim=3): H*W, D*H, D*W rows.
    pooled = jnp.concatenate([xd_sum * (1.0 / d)] + xh_parts + xw_parts, axis=0)

    # ---- squeeze: ONE fused 1x1 conv (BN scale folded into w1) + bias + ReLU
    y = jnp.dot(pooled.astype(jnp.bfloat16), w1_ref[...],
                preferred_element_type=jnp.float32)
    y = jnp.maximum(y + b1_ref[...], 0.0).astype(jnp.bfloat16)  # (hw+dh+dw, C/r)

    # ---- excite: per-branch 1x1 conv (bf16 operands) + sigmoid on EUP -------
    def excite(rows, wref):
        z = jnp.dot(rows, wref[...], preferred_element_type=jnp.float32)
        return pl.reciprocal(1.0 + jnp.exp(-z), approx=True)

    s_d = excite(y[:hw], wd_ref)                  # (H*W, C): same for every D
    s_h = excite(y[hw:hw + dh], wh_ref)           # (D*H, C): broadcast over W
    s_w = excite(y[hw + dh:], ww_ref)             # (D*W, C): broadcast over H

    # ---- apply the gates: broadcasts / concats only, no replication matmul --
    for di in range(d):
        sl = x_ref[0, di]                                         # (H*W, C)
        sw_blk = s_w[di * w:(di + 1) * w]                         # (W, C)
        gw = jnp.concatenate([sw_blk] * h, axis=0)                # repeat over H
        sh_blk = s_h[di * h:(di + 1) * h]                         # (H, C)
        gh = jnp.concatenate(                                     # repeat over W
            [jnp.broadcast_to(sh_blk[hi:hi + 1, :], (w, c)) for hi in range(h)],
            axis=0)                                               # (H*W, C)
        o_ref[0, di] = (sl * s_d * gh * gw).astype(o_ref.dtype)


# ------------------------------ wrappers ------------------------------

def ca_block_forward_ndhwc(x_ndhwc, params):
    """Channels-last CA_Block forward.  x: (B, D, H, W, C); returns same shape/dtype."""
    b, d, h, w, c = x_ndhwc.shape
    c_out = params["w1_folded"].shape[1]
    assert h % 8 == 0 and w % 8 == 0, "H and W must be multiples of 8"
    assert c % 128 == 0, "C must be a multiple of 128 (lane-dense layout)"

    hw = h * w
    x_flat = x_ndhwc.reshape(b, d, hw, c)          # free metadata reshape
    kernel = functools.partial(_ca_block_kernel, h=h, w=w)

    out = pl.pallas_call(
        kernel,
        out_shape=jax.ShapeDtypeStruct((b, d, hw, c), x_ndhwc.dtype),
        grid_spec=pltpu.PrefetchScalarGridSpec(
            num_scalar_prefetch=0,
            grid=(b,),
            in_specs=[
                pl.BlockSpec((1, d, hw, c), lambda n: (n, 0, 0, 0)),
                pl.BlockSpec((c, c_out), lambda n: (0, 0)),   # w1 (BN folded, bf16)
                pl.BlockSpec((1, c_out), lambda n: (0, 0)),   # BN bias (f32)
                pl.BlockSpec((c_out, c), lambda n: (0, 0)),   # F_d (bf16)
                pl.BlockSpec((c_out, c), lambda n: (0, 0)),   # F_h (bf16)
                pl.BlockSpec((c_out, c), lambda n: (0, 0)),   # F_w (bf16)
            ],
            out_specs=pl.BlockSpec((1, d, hw, c), lambda n: (n, 0, 0, 0)),
        ),
        compiler_params=pltpu.CompilerParams(
            dimension_semantics=("parallel",),          # batch across TCs (v7x)
            vmem_limit_bytes=32 * 1024 * 1024),
    )(x_flat, params["w1_folded"], params["b1_row"],
      params["wd_bf16"], params["wh_bf16"], params["ww_bf16"])
    return out.reshape(b, d, h, w, c)


def ca_block_forward(x_ncdhw, params):
    """NCDHW drop-in wrapper (PyTorch layout).  The two transposes are pure XLA
    layout glue; prefer ca_block_forward_ndhwc with channels-last activations."""
    out = ca_block_forward_ndhwc(jnp.transpose(x_ncdhw, (0, 2, 3, 4, 1)), params)
    return jnp.transpose(out, (0, 4, 1, 2, 3))


# ------------------------------ reference & params ------------------------------

def reference_forward(x, params):
    """Pure-JAX f32 reference of CA_Block.forward (inference-mode BN), NCDHW."""
    b, c, d, h, w = x.shape
    w1, scale, bias = params["w1"], params["bn_scale"], params["bn_bias"]
    x_d = jnp.mean(x, axis=2).reshape(b, c, h * w)
    x_h = jnp.mean(x, axis=4).reshape(b, c, d * h)
    x_w = jnp.mean(x, axis=3).reshape(b, c, d * w)
    cat = jnp.concatenate([x_d, x_h, x_w], axis=2)            # (b, c, L)
    y = jnp.einsum("bcl,co->bol", cat, w1)
    y = jax.nn.relu(y * scale[None, :, None] + bias[None, :, None])
    y_d = y[:, :, :h * w]
    y_h = y[:, :, h * w:h * w + d * h]
    y_w = y[:, :, h * w + d * h:]
    s_d = jax.nn.sigmoid(jnp.einsum("bol,oc->bcl", y_d, params["wd"])
                         ).reshape(b, c, 1, h, w)
    s_h = jax.nn.sigmoid(jnp.einsum("bol,oc->bcl", y_h, params["wh"])
                         ).reshape(b, c, d, h, 1)
    s_w = jax.nn.sigmoid(jnp.einsum("bol,oc->bcl", y_w, params["ww"])
                         ).reshape(b, c, d, 1, w)
    return x * s_d * s_h * s_w


def init_params(key, channel, reduction=16):
    c, co = channel, channel // reduction
    ks = jax.random.split(key, 8)
    w1 = jax.random.normal(ks[0], (c, co), jnp.float32) / math.sqrt(c)
    wd = jax.random.normal(ks[1], (co, c), jnp.float32) / math.sqrt(co)
    wh = jax.random.normal(ks[2], (co, c), jnp.float32) / math.sqrt(co)
    ww = jax.random.normal(ks[3], (co, c), jnp.float32) / math.sqrt(co)
    gamma = 1.0 + 0.1 * jax.random.normal(ks[4], (co,), jnp.float32)
    beta = 0.1 * jax.random.normal(ks[5], (co,), jnp.float32)
    rmean = 0.1 * jax.random.normal(ks[6], (co,), jnp.float32)
    rvar = 1.0 + 0.1 * jnp.abs(jax.random.normal(ks[7], (co,), jnp.float32))
    scale = gamma / jnp.sqrt(rvar + 1e-5)
    bias = beta - rmean * scale
    return dict(
        # f32 originals (used by the pure-JAX reference)
        w1=w1, wd=wd, wh=wh, ww=ww, bn_scale=scale, bn_bias=bias,
        # kernel-side params: BN scale folded into squeeze weight, bf16 operands
        w1_folded=(w1 * scale[None, :]).astype(jnp.bfloat16),
        b1_row=bias.reshape(1, co),
        wd_bf16=wd.astype(jnp.bfloat16),
        wh_bf16=wh.astype(jnp.bfloat16),
        ww_bf16=ww.astype(jnp.bfloat16),
    )


if __name__ == "__main__":
    key = jax.random.PRNGKey(0)
    kx, kp = jax.random.split(key)
    # channel must be divisible by reduction=16; small spatial dims.
    B, C, D, H, W = 2, 128, 4, 8, 8
    x = 0.5 * jax.random.normal(kx, (B, C, D, H, W), jnp.float32)
    params = init_params(kp, C, reduction=16)

    # Keep activations channels-last + bf16 around the kernel (review: removes
    # NCDHW<->NDHWC HBM round trips and halves I/O bytes).
    x_bf = x.astype(jnp.bfloat16)
    x_ndhwc = jnp.transpose(x_bf, (0, 2, 3, 4, 1))

    out_ndhwc = jax.jit(ca_block_forward_ndhwc)(x_ndhwc, params)
    out_ndhwc = jax.block_until_ready(out_ndhwc)
    assert out_ndhwc.shape == (B, D, H, W, C), out_ndhwc.shape
    assert out_ndhwc.dtype == x_ndhwc.dtype

    # f32 reference (PyTorch NCDHW semantics) on the same bf16-quantized input.
    ref = reference_forward(x_bf.astype(jnp.float32), params)
    out_ncdhw = jnp.transpose(out_ndhwc.astype(jnp.float32), (0, 4, 1, 2, 3))
    err = float(jnp.max(jnp.abs(out_ncdhw - ref)))
    assert err < 1e-2, f"max abs err {err}"
    print("KERNEL_OK")
</pallas_src>

<mosaic_0001>
module attributes {stable_mosaic.version = 11 : i64} {
  func.func @_ca_block_kernel(%arg0: i32, %arg1: memref<1x4x64x128xbf16, #tpu.memory_space<vmem>>, %arg2: memref<128x8xbf16, #tpu.memory_space<vmem>>, %arg3: memref<1x8xf32, #tpu.memory_space<vmem>>, %arg4: memref<8x128xbf16, #tpu.memory_space<vmem>>, %arg5: memref<8x128xbf16, #tpu.memory_space<vmem>>, %arg6: memref<8x128xbf16, #tpu.memory_space<vmem>>, %arg7: memref<1x4x64x128xbf16, #tpu.memory_space<vmem>>) attributes {dimension_semantics = [#tpu.dimension_semantics<parallel>], iteration_bounds = array<i64: 2>, scalar_prefetch = 0 : i64, scratch_operands = 0 : i64, tpu.core_type = #tpu.core_type<tc>, window_params = [{transform_indices = @transform_0, window_bounds = array<i64: 1, 4, 64, 128>}, {pipeline_mode = #tpu.pipeline_mode<synchronous>, transform_indices = @transform_1, window_bounds = array<i64: 128, 8>}, {pipeline_mode = #tpu.pipeline_mode<synchronous>, transform_indices = @transform_2, window_bounds = array<i64: 1, 8>}, {pipeline_mode = #tpu.pipeline_mode<synchronous>, transform_indices = @transform_3, window_bounds = array<i64: 8, 128>}, {pipeline_mode = #tpu.pipeline_mode<synchronous>, transform_indices = @transform_4, window_bounds = array<i64: 8, 128>}, {pipeline_mode = #tpu.pipeline_mode<synchronous>, transform_indices = @transform_5, window_bounds = array<i64: 8, 128>}, {transform_indices = @transform_6, window_bounds = array<i64: 1, 4, 64, 128>}]} {
    %cst = arith.constant 0.000000e+00 : f32
    %0 = vector.broadcast %cst : f32 to vector<64x128xf32>
    %c0 = arith.constant 0 : index
    %c0_0 = arith.constant 0 : index
    %c0_1 = arith.constant 0 : index
    %c0_2 = arith.constant 0 : index
    %1 = vector.load %arg1[%c0, %c0_0, %c0_1, %c0_2] : memref<1x4x64x128xbf16, #tpu.memory_space<vmem>>, vector<1x1x64x128xbf16>
    %2 = vector.shape_cast %1 : vector<1x1x64x128xbf16> to vector<64x128xbf16>
    %3 = arith.extf %2 : vector<64x128xbf16> to vector<64x128xf32>
    %4 = vector.shape_cast %3 : vector<64x128xf32> to vector<8x8x128xf32>
    %5 = arith.addf %0, %3 : vector<64x128xf32>
    %cst_3 = arith.constant dense<0.000000e+00> : vector<8x128xf32>
    %6 = vector.multi_reduction <add>, %4, %cst_3 [1] : vector<8x8x128xf32> to vector<8x128xf32>
    %cst_4 = arith.constant 8.000000e+00 : f32
    %7 = vector.broadcast %cst_4 : f32 to vector<8x128xf32>
    %8 = arith.divf %6, %7 : vector<8x128xf32>
    %cst_5 = arith.constant dense<0.000000e+00> : vector<8x128xf32>
    %9 = vector.multi_reduction <add>, %4, %cst_5 [0] : vector<8x8x128xf32> to vector<8x128xf32>
    %cst_6 = arith.constant 8.000000e+00 : f32
    %10 = vector.broadcast %cst_6 : f32 to vector<8x128xf32>
    %11 = arith.divf %9, %10 : vector<8x128xf32>
    %c0_7 = arith.constant 0 : index
    %c1 = arith.constant 1 : index
    %c0_8 = arith.constant 0 : index
    %c0_9 = arith.constant 0 : index
    %12 = vector.load %arg1[%c0_7, %c1, %c0_8, %c0_9] : memref<1x4x64x128xbf16, #tpu.memory_space<vmem>>, vector<1x1x64x128xbf16>
    %13 = vector.shape_cast %12 : vector<1x1x64x128xbf16> to vector<64x128xbf16>
    %14 = arith.extf %13 : vector<64x128xbf16> to vector<64x128xf32>
    %15 = vector.shape_cast %14 : vector<64x128xf32> to vector<8x8x128xf32>
    %16 = arith.addf %5, %14 : vector<64x128xf32>
    %cst_10 = arith.constant dense<0.000000e+00> : vector<8x128xf32>
    %17 = vector.multi_reduction <add>, %15, %cst_10 [1] : vector<8x8x128xf32> to vector<8x128xf32>
    %cst_11 = arith.constant 8.000000e+00 : f32
    %18 = vector.broadcast %cst_11 : f32 to vector<8x128xf32>
    %19 = arith.divf %17, %18 : vector<8x128xf32>
    %cst_12 = arith.constant dense<0.000000e+00> : vector<8x128xf32>
    %20 = vector.multi_reduction <add>, %15, %cst_12 [0] : vector<8x8x128xf32> to vector<8x128xf32>
    %cst_13 = arith.constant 8.000000e+00 : f32
    %21 = vector.broadcast %cst_13 : f32 to vector<8x128xf32>
    %22 = arith.divf %20, %21 : vector<8x128xf32>
    %c0_14 = arith.constant 0 : index
    %c2 = arith.constant 2 : index
    %c0_15 = arith.constant 0 : index
    %c0_16 = arith.constant 0 : index
    %23 = vector.load %arg1[%c0_14, %c2, %c0_15, %c0_16] : memref<1x4x64x128xbf16, #tpu.memory_space<vmem>>, vector<1x1x64x128xbf16>
    %24 = vector.shape_cast %23 : vector<1x1x64x128xbf16> to vector<64x128xbf16>
    %25 = arith.extf %24 : vector<64x128xbf16> to vector<64x128xf32>
    %26 = vector.shape_cast %25 : vector<64x128xf32> to vector<8x8x128xf32>
    %27 = arith.addf %16, %25 : vector<64x128xf32>
    %cst_17 = arith.constant dense<0.000000e+00> : vector<8x128xf32>
    %28 = vector.multi_reduction <add>, %26, %cst_17 [1] : vector<8x8x128xf32> to vector<8x128xf32>
    %cst_18 = arith.constant 8.000000e+00 : f32
    %29 = vector.broadcast %cst_18 : f32 to vector<8x128xf32>
    %30 = arith.divf %28, %29 : vector<8x128xf32>
    %cst_19 = arith.constant dense<0.000000e+00> : vector<8x128xf32>
    %31 = vector.multi_reduction <add>, %26, %cst_19 [0] : vector<8x8x128xf32> to vector<8x128xf32>
    %cst_20 = arith.constant 8.000000e+00 : f32
    %32 = vector.broadcast %cst_20 : f32 to vector<8x128xf32>
    %33 = arith.divf %31, %32 : vector<8x128xf32>
    %c0_21 = arith.constant 0 : index
    %c3 = arith.constant 3 : index
    %c0_22 = arith.constant 0 : index
    %c0_23 = arith.constant 0 : index
    %34 = vector.load %arg1[%c0_21, %c3, %c0_22, %c0_23] : memref<1x4x64x128xbf16, #tpu.memory_space<vmem>>, vector<1x1x64x128xbf16>
    %35 = vector.shape_cast %34 : vector<1x1x64x128xbf16> to vector<64x128xbf16>
    %36 = arith.extf %35 : vector<64x128xbf16> to vector<64x128xf32>
    %37 = vector.shape_cast %36 : vector<64x128xf32> to vector<8x8x128xf32>
    %38 = arith.addf %27, %36 : vector<64x128xf32>
    %cst_24 = arith.constant dense<0.000000e+00> : vector<8x128xf32>
    %39 = vector.multi_reduction <add>, %37, %cst_24 [1] : vector<8x8x128xf32> to vector<8x128xf32>
    %cst_25 = arith.constant 8.000000e+00 : f32
    %40 = vector.broadcast %cst_25 : f32 to vector<8x128xf32>
    %41 = arith.divf %39, %40 : vector<8x128xf32>
    %cst_26 = arith.constant dense<0.000000e+00> : vector<8x128xf32>
    %42 = vector.multi_reduction <add>, %37, %cst_26 [0] : vector<8x8x128xf32> to vector<8x128xf32>
    %cst_27 = arith.constant 8.000000e+00 : f32
    %43 = vector.broadcast %cst_27 : f32 to vector<8x128xf32>
    %44 = arith.divf %42, %43 : vector<8x128xf32>
    %cst_28 = arith.constant 2.500000e-01 : f32
    %45 = vector.broadcast %cst_28 : f32 to vector<64x128xf32>
    %46 = arith.mulf %38, %45 : vector<64x128xf32>
    %47 = tpu.concatenate %46, %8, %19, %30, %41, %11, %22, %33, %44 in 0 : vector<64x128xf32>, vector<8x128xf32>, vector<8x128xf32>, vector<8x128xf32>, vector<8x128xf32>, vector<8x128xf32>, vector<8x128xf32>, vector<8x128xf32>, vector<8x128xf32> -> vector<128x128xf32>
    %48 = arith.truncf %47 : vector<128x128xf32> to vector<128x128xbf16>
    %c0_29 = arith.constant 0 : index
    %c0_30 = arith.constant 0 : index
    %49 = vector.load %arg2[%c0_29, %c0_30] : memref<128x8xbf16, #tpu.memory_space<vmem>>, vector<128x8xbf16>
    %cst_31 = arith.constant dense<0.000000e+00> : vector<128x8xf32>
    %50 = tpu.matmul %48, %49, %cst_31 {dimension_numbers = #tpu.dot_dimension_numbers<[1], [0], [0], [1], [0, 0, 1, 1], [], []>} : vector<128x128xbf16>, vector<128x8xbf16>, vector<128x8xf32> -> vector<128x8xf32>
    %c0_32 = arith.constant 0 : index
    %c0_33 = arith.constant 0 : index
    %51 = vector.load %arg3[%c0_32, %c0_33] : memref<1x8xf32, #tpu.memory_space<vmem>>, vector<1x8xf32>
    %52 = vector.broadcast %51 : vector<1x8xf32> to vector<128x8xf32>
    %53 = arith.addf %50, %52 : vector<128x8xf32>
    %cst_34 = arith.constant 0.000000e+00 : f32
    %54 = vector.broadcast %cst_34 : f32 to vector<128x8xf32>
    %55 = arith.maximumf %53, %54 : vector<128x8xf32>
    %56 = arith.truncf %55 : vector<128x8xf32> to vector<128x8xbf16>
    %57 = vector.extract_strided_slice %56 {offsets = [0, 0], sizes = [64, 8], strides = [1, 1]} : vector<128x8xbf16> to vector<64x8xbf16>
    %c0_35 = arith.constant 0 : index
    %c0_36 = arith.constant 0 : index
    %58 = vector.load %arg4[%c0_35, %c0_36] : memref<8x128xbf16, #tpu.memory_space<vmem>>, vector<8x128xbf16>
    %cst_37 = arith.constant dense<0.000000e+00> : vector<64x128xf32>
    %59 = tpu.matmul %57, %58, %cst_37 {dimension_numbers = #tpu.dot_dimension_numbers<[1], [0], [0], [1], [0, 0, 1, 1], [], []>} : vector<64x8xbf16>, vector<8x128xbf16>, vector<64x128xf32> -> vector<64x128xf32>
    %cst_38 = arith.constant 0.000000e+00 : f32
    %60 = vector.broadcast %cst_38 : f32 to vector<64x128xf32>
    %61 = arith.subf %60, %59 : vector<64x128xf32>
    %62 = math.exp %61 : vector<64x128xf32>
    %cst_39 = arith.constant 1.000000e+00 : f32
    %63 = vector.broadcast %cst_39 : f32 to vector<64x128xf32>
    %64 = arith.addf %63, %62 : vector<64x128xf32>
    %65 = tpu.reciprocal %64 {approx = true} : vector<64x128xf32> -> vector<64x128xf32>
    %66 = vector.extract_strided_slice %56 {offsets = [64, 0], sizes = [32, 8], strides = [1, 1]} : vector<128x8xbf16> to vector<32x8xbf16>
    %c0_40 = arith.constant 0 : index
    %c0_41 = arith.constant 0 : index
    %67 = vector.load %arg5[%c0_40, %c0_41] : memref<8x128xbf16, #tpu.memory_space<vmem>>, vector<8x128xbf16>
    %cst_42 = arith.constant dense<0.000000e+00> : vector<32x128xf32>
    %68 = tpu.matmul %66, %67, %cst_42 {dimension_numbers = #tpu.dot_dimension_numbers<[1], [0], [0], [1], [0, 0, 1, 1], [], []>} : vector<32x8xbf16>, vector<8x128xbf16>, vector<32x128xf32> -> vector<32x128xf32>
    %cst_43 = arith.constant 0.000000e+00 : f32
    %69 = vector.broadcast %cst_43 : f32 to vector<32x128xf32>
    %70 = arith.subf %69, %68 : vector<32x128xf32>
    %71 = math.exp %70 : vector<32x128xf32>
    %cst_44 = arith.constant 1.000000e+00 : f32
    %72 = vector.broadcast %cst_44 : f32 to vector<32x128xf32>
    %73 = arith.addf %72, %71 : vector<32x128xf32>
    %74 = tpu.reciprocal %73 {approx = true} : vector<32x128xf32> -> vector<32x128xf32>
    %75 = vector.extract_strided_slice %56 {offsets = [96, 0], sizes = [32, 8], strides = [1, 1]} : vector<128x8xbf16> to vector<32x8xbf16>
    %c0_45 = arith.constant 0 : index
    %c0_46 = arith.constant 0 : index
    %76 = vector.load %arg6[%c0_45, %c0_46] : memref<8x128xbf16, #tpu.memory_space<vmem>>, vector<8x128xbf16>
    %cst_47 = arith.constant dense<0.000000e+00> : vector<32x128xf32>
    %77 = tpu.matmul %75, %76, %cst_47 {dimension_numbers = #tpu.dot_dimension_numbers<[1], [0], [0], [1], [0, 0, 1, 1], [], []>} : vector<32x8xbf16>, vector<8x128xbf16>, vector<32x128xf32> -> vector<32x128xf32>
    %cst_48 = arith.constant 0.000000e+00 : f32
    %78 = vector.broadcast %cst_48 : f32 to vector<32x128xf32>
    %79 = arith.subf %78, %77 : vector<32x128xf32>
    %80 = math.exp %79 : vector<32x128xf32>
    %cst_49 = arith.constant 1.000000e+00 : f32
    %81 = vector.broadcast %cst_49 : f32 to vector<32x128xf32>
    %82 = arith.addf %81, %80 : vector<32x128xf32>
    %83 = tpu.reciprocal %82 {approx = true} : vector<32x128xf32> -> vector<32x128xf32>
    %c0_50 = arith.constant 0 : index
    %c0_51 = arith.constant 0 : index
    %c0_52 = arith.constant 0 : index
    %c0_53 = arith.constant 0 : index
    %84 = vector.load %arg1[%c0_50, %c0_51, %c0_52, %c0_53] : memref<1x4x64x128xbf16, #tpu.memory_space<vmem>>, vector<1x1x64x128xbf16>
    %85 = vector.shape_cast %84 : vector<1x1x64x128xbf16> to vector<64x128xbf16>
    %86 = vector.extract_strided_slice %83 {offsets = [0, 0], sizes = [8, 128], strides = [1, 1]} : vector<32x128xf32> to vector<8x128xf32>
    %87 = tpu.concatenate %86, %86, %86, %86, %86, %86, %86, %86 in 0 : vector<8x128xf32>, vector<8x128xf32>, vector<8x128xf32>, vector<8x128xf32>, vector<8x128xf32>, vector<8x128xf32>, vector<8x128xf32>, vector<8x128xf32> -> vector<64x128xf32>
    %88 = vector.extract_strided_slice %74 {offsets = [0, 0], sizes = [8, 128], strides = [1, 1]} : vector<32x128xf32> to vector<8x128xf32>
    %89 = vector.extract_strided_slice %88 {offsets = [0, 0], sizes = [1, 128], strides = [1, 1]} : vector<8x128xf32> to vector<1x128xf32>
    %90 = vector.shape_cast %89 : vector<1x128xf32> to vector<1x128xf32>
    %91 = vector.broadcast %90 : vector<1x128xf32> to vector<8x128xf32>
    %92 = vector.extract_strided_slice %88 {offsets = [1, 0], sizes = [1, 128], strides = [1, 1]} : vector<8x128xf32> to vector<1x128xf32>
    %93 = vector.shape_cast %92 : vector<1x128xf32> to vector<1x128xf32>
    %94 = vector.broadcast %93 : vector<1x128xf32> to vector<8x128xf32>
    %95 = vector.extract_strided_slice %88 {offsets = [2, 0], sizes = [1, 128], strides = [1, 1]} : vector<8x128xf32> to vector<1x128xf32>
    %96 = vector.shape_cast %95 : vector<1x128xf32> to vector<1x128xf32>
    %97 = vector.broadcast %96 : vector<1x128xf32> to vector<8x128xf32>
    %98 = vector.extract_strided_slice %88 {offsets = [3, 0], sizes = [1, 128], strides = [1, 1]} : vector<8x128xf32> to vector<1x128xf32>
    %99 = vector.shape_cast %98 : vector<1x128xf32> to vector<1x128xf32>
    %100 = vector.broadcast %99 : vector<1x128xf32> to vector<8x128xf32>
    %101 = vector.extract_strided_slice %88 {offsets = [4, 0], sizes = [1, 128], strides = [1, 1]} : vector<8x128xf32> to vector<1x128xf32>
    %102 = vector.shape_cast %101 : vector<1x128xf32> to vector<1x128xf32>
    %103 = vector.broadcast %102 : vector<1x128xf32> to vector<8x128xf32>
    %104 = vector.extract_strided_slice %88 {offsets = [5, 0], sizes = [1, 128], strides = [1, 1]} : vector<8x128xf32> to vector<1x128xf32>
    %105 = vector.shape_cast %104 : vector<1x128xf32> to vector<1x128xf32>
    %106 = vector.broadcast %105 : vector<1x128xf32> to vector<8x128xf32>
    %107 = vector.extract_strided_slice %88 {offsets = [6, 0], sizes = [1, 128], strides = [1, 1]} : vector<8x128xf32> to vector<1x128xf32>
    %108 = vector.shape_cast %107 : vector<1x128xf32> to vector<1x128xf32>
    %109 = vector.broadcast %108 : vector<1x128xf32> to vector<8x128xf32>
    %110 = vector.extract_strided_slice %88 {offsets = [7, 0], sizes = [1, 128], strides = [1, 1]} : vector<8x128xf32> to vector<1x128xf32>
    %111 = vector.shape_cast %110 : vector<1x128xf32> to vector<1x128xf32>
    %112 = vector.broadcast %111 : vector<1x128xf32> to vector<8x128xf32>
    %113 = tpu.concatenate %91, %94, %97, %100, %103, %106, %109, %112 in 0 : vector<8x128xf32>, vector<8x128xf32>, vector<8x128xf32>, vector<8x128xf32>, vector<8x128xf32>, vector<8x128xf32>, vector<8x128xf32>, vector<8x128xf32> -> vector<64x128xf32>
    %114 = arith.extf %85 : vector<64x128xbf16> to vector<64x128xf32>
    %115 = arith.mulf %114, %65 : vector<64x128xf32>
    %116 = arith.mulf %115, %113 : vector<64x128xf32>
    %117 = arith.mulf %116, %87 : vector<64x128xf32>
    %118 = arith.truncf %117 : vector<64x128xf32> to vector<64x128xbf16>
    %c0_54 = arith.constant 0 : index
    %c0_55 = arith.constant 0 : index
    %c0_56 = arith.constant 0 : index
    %c0_57 = arith.constant 0 : index
    %119 = vector.load %arg7[%c0_54, %c0_55, %c0_56, %c0_57] : memref<1x4x64x128xbf16, #tpu.memory_space<vmem>>, vector<1x1x64x128xbf16>
    %120 = vector.shape_cast %119 : vector<1x1x64x128xbf16> to vector<64x128xbf16>
    %121 = vector.shape_cast %118 : vector<64x128xbf16> to vector<1x1x64x128xbf16>
    tpu.vector_store %arg7[%c0_54, %c0_55, %c0_56, %c0_57], %121 {strides = array<i32>} : memref<1x4x64x128xbf16, #tpu.memory_space<vmem>>, vector<1x1x64x128xbf16>,
    %c0_58 = arith.constant 0 : index
    %c1_59 = arith.constant 1 : index
    %c0_60 = arith.constant 0 : index
    %c0_61 = arith.constant 0 : index
    %122 = vector.load %arg1[%c0_58, %c1_59, %c0_60, %c0_61] : memref<1x4x64x128xbf16, #tpu.memory_space<vmem>>, vector<1x1x64x128xbf16>
    %123 = vector.shape_cast %122 : vector<1x1x64x128xbf16> to vector<64x128xbf16>
    %124 = vector.extract_strided_slice %83 {offsets = [8, 0], sizes = [8, 128], strides = [1, 1]} : vector<32x128xf32> to vector<8x128xf32>
    %125 = tpu.concatenate %124, %124, %124, %124, %124, %124, %124, %124 in 0 : vector<8x128xf32>, vector<8x128xf32>, vector<8x128xf32>, vector<8x128xf32>, vector<8x128xf32>, vector<8x128xf32>, vector<8x128xf32>, vector<8x128xf32> -> vector<64x128xf32>
    %126 = vector.extract_strided_slice %74 {offsets = [8, 0], sizes = [8, 128], strides = [1, 1]} : vector<32x128xf32> to vector<8x128xf32>
    %127 = vector.extract_strided_slice %126 {offsets = [0, 0], sizes = [1, 128], strides = [1, 1]} : vector<8x128xf32> to vector<1x128xf32>
    %128 = vector.shape_cast %127 : vector<1x128xf32> to vector<1x128xf32>
    %129 = vector.broadcast %128 : vector<1x128xf32> to vector<8x128xf32>
    %130 = vector.extract_strided_slice %126 {offsets = [1, 0], sizes = [1, 128], strides = [1, 1]} : vector<8x128xf32> to vector<1x128xf32>
    %131 = vector.shape_cast %130 : vector<1x128xf32> to vector<1x128xf32>
    %132 = vector.broadcast %131 : vector<1x128xf32> to vector<8x128xf32>
    %133 = vector.extract_strided_slice %126 {offsets = [2, 0], sizes = [1, 128], strides = [1, 1]} : vector<8x128xf32> to vector<1x128xf32>
    %134 = vector.shape_cast %133 : vector<1x128xf32> to vector<1x128xf32>
    %135 = vector.broadcast %134 : vector<1x128xf32> to vector<8x128xf32>
    %136 = vector.extract_strided_slice %126 {offsets = [3, 0], sizes = [1, 128], strides = [1, 1]} : vector<8x128xf32> to vector<1x128xf32>
    %137 = vector.shape_cast %136 : vector<1x128xf32> to vector<1x128xf32>
    %138 = vector.broadcast %137 : vector<1x128xf32> to vector<8x128xf32>
    %139 = vector.extract_strided_slice %126 {offsets = [4, 0], sizes = [1, 128], strides = [1, 1]} : vector<8x128xf32> to vector<1x128xf32>
    %140 = vector.shape_cast %139 : vector<1x128xf32> to vector<1x128xf32>
    %141 = vector.broadcast %140 : vector<1x128xf32> to vector<8x128xf32>
    %142 = vector.extract_strided_slice %126 {offsets = [5, 0], sizes = [1, 128], strides = [1, 1]} : vector<8x128xf32> to vector<1x128xf32>
    %143 = vector.shape_cast %142 : vector<1x128xf32> to vector<1x128xf32>
    %144 = vector.broadcast %143 : vector<1x128xf32> to vector<8x128xf32>
    %145 = vector.extract_strided_slice %126 {offsets = [6, 0], sizes = [1, 128], strides = [1, 1]} : vector<8x128xf32> to vector<1x128xf32>
    %146 = vector.shape_cast %145 : vector<1x128xf32> to vector<1x128xf32>
    %147 = vector.broadcast %146 : vector<1x128xf32> to vector<8x128xf32>
    %148 = vector.extract_strided_slice %126 {offsets = [7, 0], sizes = [1, 128], strides = [1, 1]} : vector<8x128xf32> to vector<1x128xf32>
    %149 = vector.shape_cast %148 : vector<1x128xf32> to vector<1x128xf32>
    %150 = vector.broadcast %149 : vector<1x128xf32> to vector<8x128xf32>
    %151 = tpu.concatenate %129, %132, %135, %138, %141, %144, %147, %150 in 0 : vector<8x128xf32>, vector<8x128xf32>, vector<8x128xf32>, vector<8x128xf32>, vector<8x128xf32>, vector<8x128xf32>, vector<8x128xf32>, vector<8x128xf32> -> vector<64x128xf32>
    %152 = arith.extf %123 : vector<64x128xbf16> to vector<64x128xf32>
    %153 = arith.mulf %152, %65 : vector<64x128xf32>
    %154 = arith.mulf %153, %151 : vector<64x128xf32>
    %155 = arith.mulf %154, %125 : vector<64x128xf32>
    %156 = arith.truncf %155 : vector<64x128xf32> to vector<64x128xbf16>
    %c0_62 = arith.constant 0 : index
    %c1_63 = arith.constant 1 : index
    %c0_64 = arith.constant 0 : index
    %c0_65 = arith.constant 0 : index
    %157 = vector.load %arg7[%c0_62, %c1_63, %c0_64, %c0_65] : memref<1x4x64x128xbf16, #tpu.memory_space<vmem>>, vector<1x1x64x128xbf16>
    %158 = vector.shape_cast %157 : vector<1x1x64x128xbf16> to vector<64x128xbf16>
    %159 = vector.shape_cast %156 : vector<64x128xbf16> to vector<1x1x64x128xbf16>
    tpu.vector_store %arg7[%c0_62, %c1_63, %c0_64, %c0_65], %159 {strides = array<i32>} : memref<1x4x64x128xbf16, #tpu.memory_space<vmem>>, vector<1x1x64x128xbf16>,
    %c0_66 = arith.constant 0 : index
    %c2_67 = arith.constant 2 : index
    %c0_68 = arith.constant 0 : index
    %c0_69 = arith.constant 0 : index
    %160 = vector.load %arg1[%c0_66, %c2_67, %c0_68, %c0_69] : memref<1x4x64x128xbf16, #tpu.memory_space<vmem>>, vector<1x1x64x128xbf16>
    %161 = vector.shape_cast %160 : vector<1x1x64x128xbf16> to vector<64x128xbf16>
    %162 = vector.extract_strided_slice %83 {offsets = [16, 0], sizes = [8, 128], strides = [1, 1]} : vector<32x128xf32> to vector<8x128xf32>
    %163 = tpu.concatenate %162, %162, %162, %162, %162, %162, %162, %162 in 0 : vector<8x128xf32>, vector<8x128xf32>, vector<8x128xf32>, vector<8x128xf32>, vector<8x128xf32>, vector<8x128xf32>, vector<8x128xf32>, vector<8x128xf32> -> vector<64x128xf32>
    %164 = vector.extract_strided_slice %74 {offsets = [16, 0], sizes = [8, 128], strides = [1, 1]} : vector<32x128xf32> to vector<8x128xf32>
    %165 = vector.extract_strided_slice %164 {offsets = [0, 0], sizes = [1, 128], strides = [1, 1]} : vector<8x128xf32> to vector<1x128xf32>
    %166 = vector.shape_cast %165 : vector<1x128xf32> to vector<1x128xf32>
    %167 = vector.broadcast %166 : vector<1x128xf32> to vector<8x128xf32>
    %168 = vector.extract_strided_slice %164 {offsets = [1, 0], sizes = [1, 128], strides = [1, 1]} : vector<8x128xf32> to vector<1x128xf32>
    %169 = vector.shape_cast %168 : vector<1x128xf32> to vector<1x128xf32>
    %170 = vector.broadcast %169 : vector<1x128xf32> to vector<8x128xf32>
    %171 = vector.extract_strided_slice %164 {offsets = [2, 0], sizes = [1, 128], strides = [1, 1]} : vector<8x128xf32> to vector<1x128xf32>
    %172 = vector.shape_cast %171 : vector<1x128xf32> to vector<1x128xf32>
    %173 = vector.broadcast %172 : vector<1x128xf32> to vector<8x128xf32>
    %174 = vector.extract_strided_slice %164 {offsets = [3, 0], sizes = [1, 128], strides = [1, 1]} : vector<8x128xf32> to vector<1x128xf32>
    %175 = vector.shape_cast %174 : vector<1x128xf32> to vector<1x128xf32>
    %176 = vector.broadcast %175 : vector<1x128xf32> to vector<8x128xf32>
    %177 = vector.extract_strided_slice %164 {offsets = [4, 0], sizes = [1, 128], strides = [1, 1]} : vector<8x128xf32> to vector<1x128xf32>
    %178 = vector.shape_cast %177 : vector<1x128xf32> to vector<1x128xf32>
    %179 = vector.broadcast %178 : vector<1x128xf32> to vector<8x128xf32>
    %180 = vector.extract_strided_slice %164 {offsets = [5, 0], sizes = [1, 128], strides = [1, 1]} : vector<8x128xf32> to vector<1x128xf32>
    %181 = vector.shape_cast %180 : vector<1x128xf32> to vector<1x128xf32>
    %182 = vector.broadcast %181 : vector<1x128xf32> to vector<8x128xf32>
    %183 = vector.extract_strided_slice %164 {offsets = [6, 0], sizes = [1, 128], strides = [1, 1]} : vector<8x128xf32> to vector<1x128xf32>
    %184 = vector.shape_cast %183 : vector<1x128xf32> to vector<1x128xf32>
    %185 = vector.broadcast %184 : vector<1x128xf32> to vector<8x128xf32>
    %186 = vector.extract_strided_slice %164 {offsets = [7, 0], sizes = [1, 128], strides = [1, 1]} : vector<8x128xf32> to vector<1x128xf32>
    %187 = vector.shape_cast %186 : vector<1x128xf32> to vector<1x128xf32>
    %188 = vector.broadcast %187 : vector<1x128xf32> to vector<8x128xf32>
    %189 = tpu.concatenate %167, %170, %173, %176, %179, %182, %185, %188 in 0 : vector<8x128xf32>, vector<8x128xf32>, vector<8x128xf32>, vector<8x128xf32>, vector<8x128xf32>, vector<8x128xf32>, vector<8x128xf32>, vector<8x128xf32> -> vector<64x128xf32>
    %190 = arith.extf %161 : vector<64x128xbf16> to vector<64x128xf32>
    %191 = arith.mulf %190, %65 : vector<64x128xf32>
    %192 = arith.mulf %191, %189 : vector<64x128xf32>
    %193 = arith.mulf %192, %163 : vector<64x128xf32>
    %194 = arith.truncf %193 : vector<64x128xf32> to vector<64x128xbf16>
    %c0_70 = arith.constant 0 : index
    %c2_71 = arith.constant 2 : index
    %c0_72 = arith.constant 0 : index
    %c0_73 = arith.constant 0 : index
    %195 = vector.load %arg7[%c0_70, %c2_71, %c0_72, %c0_73] : memref<1x4x64x128xbf16, #tpu.memory_space<vmem>>, vector<1x1x64x128xbf16>
    %196 = vector.shape_cast %195 : vector<1x1x64x128xbf16> to vector<64x128xbf16>
    %197 = vector.shape_cast %194 : vector<64x128xbf16> to vector<1x1x64x128xbf16>
    tpu.vector_store %arg7[%c0_70, %c2_71, %c0_72, %c0_73], %197 {strides = array<i32>} : memref<1x4x64x128xbf16, #tpu.memory_space<vmem>>, vector<1x1x64x128xbf16>,
    %c0_74 = arith.constant 0 : index
    %c3_75 = arith.constant 3 : index
    %c0_76 = arith.constant 0 : index
    %c0_77 = arith.constant 0 : index
    %198 = vector.load %arg1[%c0_74, %c3_75, %c0_76, %c0_77] : memref<1x4x64x128xbf16, #tpu.memory_space<vmem>>, vector<1x1x64x128xbf16>
    %199 = vector.shape_cast %198 : vector<1x1x64x128xbf16> to vector<64x128xbf16>
    %200 = vector.extract_strided_slice %83 {offsets = [24, 0], sizes = [8, 128], strides = [1, 1]} : vector<32x128xf32> to vector<8x128xf32>
    %201 = tpu.concatenate %200, %200, %200, %200, %200, %200, %200, %200 in 0 : vector<8x128xf32>, vector<8x128xf32>, vector<8x128xf32>, vector<8x128xf32>, vector<8x128xf32>, vector<8x128xf32>, vector<8x128xf32>, vector<8x128xf32> -> vector<64x128xf32>
    %202 = vector.extract_strided_slice %74 {offsets = [24, 0], sizes = [8, 128], strides = [1, 1]} : vector<32x128xf32> to vector<8x128xf32>
    %203 = vector.extract_strided_slice %202 {offsets = [0, 0], sizes = [1, 128], strides = [1, 1]} : vector<8x128xf32> to vector<1x128xf32>
    %204 = vector.shape_cast %203 : vector<1x128xf32> to vector<1x128xf32>
    %205 = vector.broadcast %204 : vector<1x128xf32> to vector<8x128xf32>
    %206 = vector.extract_strided_slice %202 {offsets = [1, 0], sizes = [1, 128], strides = [1, 1]} : vector<8x128xf32> to vector<1x128xf32>
    %207 = vector.shape_cast %206 : vector<1x128xf32> to vector<1x128xf32>
    %208 = vector.broadcast %207 : vector<1x128xf32> to vector<8x128xf32>
    %209 = vector.extract_strided_slice %202 {offsets = [2, 0], sizes = [1, 128], strides = [1, 1]} : vector<8x128xf32> to vector<1x128xf32>
    %210 = vector.shape_cast %209 : vector<1x128xf32> to vector<1x128xf32>
    %211 = vector.broadcast %210 : vector<1x128xf32> to vector<8x128xf32>
    %212 = vector.extract_strided_slice %202 {offsets = [3, 0], sizes = [1, 128], strides = [1, 1]} : vector<8x128xf32> to vector<1x128xf32>
    %213 = vector.shape_cast %212 : vector<1x128xf32> to vector<1x128xf32>
    %214 = vector.broadcast %213 : vector<1x128xf32> to vector<8x128xf32>
    %215 = vector.extract_strided_slice %202 {offsets = [4, 0], sizes = [1, 128], strides = [1, 1]} : vector<8x128xf32> to vector<1x128xf32>
    %216 = vector.shape_cast %215 : vector<1x128xf32> to vector<1x128xf32>
    %217 = vector.broadcast %216 : vector<1x128xf32> to vector<8x128xf32>
    %218 = vector.extract_strided_slice %202 {offsets = [5, 0], sizes = [1, 128], strides = [1, 1]} : vector<8x128xf32> to vector<1x128xf32>
    %219 = vector.shape_cast %218 : vector<1x128xf32> to vector<1x128xf32>
    %220 = vector.broadcast %219 : vector<1x128xf32> to vector<8x128xf32>
    %221 = vector.extract_strided_slice %202 {offsets = [6, 0], sizes = [1, 128], strides = [1, 1]} : vector<8x128xf32> to vector<1x128xf32>
    %222 = vector.shape_cast %221 : vector<1x128xf32> to vector<1x128xf32>
    %223 = vector.broadcast %222 : vector<1x128xf32> to vector<8x128xf32>
    %224 = vector.extract_strided_slice %202 {offsets = [7, 0], sizes = [1, 128], strides = [1, 1]} : vector<8x128xf32> to vector<1x128xf32>
    %225 = vector.shape_cast %224 : vector<1x128xf32> to vector<1x128xf32>
    %226 = vector.broadcast %225 : vector<1x128xf32> to vector<8x128xf32>
    %227 = tpu.concatenate %205, %208, %211, %214, %217, %220, %223, %226 in 0 : vector<8x128xf32>, vector<8x128xf32>, vector<8x128xf32>, vector<8x128xf32>, vector<8x128xf32>, vector<8x128xf32>, vector<8x128xf32>, vector<8x128xf32> -> vector<64x128xf32>
    %228 = arith.extf %199 : vector<64x128xbf16> to vector<64x128xf32>
    %229 = arith.mulf %228, %65 : vector<64x128xf32>
    %230 = arith.mulf %229, %227 : vector<64x128xf32>
    %231 = arith.mulf %230, %201 : vector<64x128xf32>
    %232 = arith.truncf %231 : vector<64x128xf32> to vector<64x128xbf16>
    %c0_78 = arith.constant 0 : index
    %c3_79 = arith.constant 3 : index
    %c0_80 = arith.constant 0 : index
    %c0_81 = arith.constant 0 : index
    %233 = vector.load %arg7[%c0_78, %c3_79, %c0_80, %c0_81] : memref<1x4x64x128xbf16, #tpu.memory_space<vmem>>, vector<1x1x64x128xbf16>
    %234 = vector.shape_cast %233 : vector<1x1x64x128xbf16> to vector<64x128xbf16>
    %235 = vector.shape_cast %232 : vector<64x128xbf16> to vector<1x1x64x128xbf16>
    tpu.vector_store %arg7[%c0_78, %c3_79, %c0_80, %c0_81], %235 {strides = array<i32>} : memref<1x4x64x128xbf16, #tpu.memory_space<vmem>>, vector<1x1x64x128xbf16>,
    return
  }
  func.func @transform_0(%arg0: i32) -> (i32, i32, i32, i32) {
    %c0_i32 = arith.constant 0 : i32
    %c0_i32_0 = arith.constant 0 : i32
    %c0_i32_1 = arith.constant 0 : i32
    %c0_i32_2 = arith.constant 0 : i32
    return %arg0, %c0_i32, %c0_i32_0, %c0_i32_1 : i32, i32, i32, i32
  }
  func.func @transform_1(%arg0: i32) -> (i32, i32) {
    %c0_i32 = arith.constant 0 : i32
    %c0_i32_0 = arith.constant 0 : i32
    %c0_i32_1 = arith.constant 0 : i32
    return %c0_i32, %c0_i32_0 : i32, i32
  }
  func.func @transform_2(%arg0: i32) -> (i32, i32) {
    %c0_i32 = arith.constant 0 : i32
    %c0_i32_0 = arith.constant 0 : i32
    %c0_i32_1 = arith.constant 0 : i32
    return %c0_i32, %c0_i32_0 : i32, i32
  }
  func.func @transform_3(%arg0: i32) -> (i32, i32) {
    %c0_i32 = arith.constant 0 : i32
    %c0_i32_0 = arith.constant 0 : i32
    %c0_i32_1 = arith.constant 0 : i32
    return %c0_i32, %c0_i32_0 : i32, i32
  }
  func.func @transform_4(%arg0: i32) -> (i32, i32) {
    %c0_i32 = arith.constant 0 : i32
    %c0_i32_0 = arith.constant 0 : i32
    %c0_i32_1 = arith.constant 0 : i32
    return %c0_i32, %c0_i32_0 : i32, i32
  }
  func.func @transform_5(%arg0: i32) -> (i32, i32) {
    %c0_i32 = arith.constant 0 : i32
    %c0_i32_0 = arith.constant 0 : i32
    %c0_i32_1 = arith.constant 0 : i32
    return %c0_i32, %c0_i32_0 : i32, i32
  }
  func.func @transform_6(%arg0: i32) -> (i32, i32, i32, i32) {
    %c0_i32 = arith.constant 0 : i32
    %c0_i32_0 = arith.constant 0 : i32
    %c0_i32_1 = arith.constant 0 : i32
    %c0_i32_2 = arith.constant 0 : i32
    return %arg0, %c0_i32, %c0_i32_0, %c0_i32_1 : i32, i32, i32, i32
  }
}

</mosaic_0001>

<llo_original>
// kernel: ca_block_forward_ndhwc.1
$region0: #{ca_block_forward_ndhwc.1}
  #allocation0 [shape = 'u32[]', space=smem, size = 0x4, offset = 0x4, fixed_abs, tag = 'smem constant byte address 0x4 - core index']
  #allocation1 [shape = 'u32[144,128]{1,0:T(1,128)}', space=vmem, size = 0x12000, scoped, tag = 'internal scratch']
  %s0 = inlined_call_operand.hbm [shape: bf16[2,4,64,128], index: 0, kind: input, shape index: {}]
  %s1 = inlined_call_operand.vmem [shape: bf16[128,8], index: 1, kind: input, shape index: {}]
  %s2 = inlined_call_operand.vmem [shape: f32[1,8], index: 2, kind: input, shape index: {}]
  %s3 = inlined_call_operand.vmem [shape: bf16[8,128], index: 3, kind: input, shape index: {}]
  %s4 = inlined_call_operand.vmem [shape: bf16[8,128], index: 4, kind: input, shape index: {}]
  %s5 = inlined_call_operand.vmem [shape: bf16[8,128], index: 5, kind: input, shape index: {}]
  %s6 = inlined_call_operand.hbm [shape: bf16[2,4,64,128], index: 6, kind: output, shape index: {}]
  %s7 = sld [smem:[#allocation0]]
  $region61: #{ca_block_forward_ndhwc.1} parent=0
    _
  %s9 = ssub.s32 1, %s7
  %s10 = scalar_select 0, %s9, %s7
  $region1: #{ca_block_forward_ndhwc.1} parent=0
    #allocation2 [shape = 'u8[131072]{0}', space=vmem, size = 0x20000, scoped, tag = 'input window, operand 0']
    #allocation3 [shape = 's32[2]{0}', space=sflag, size = 0x8, scoped, tag = 'scoped memory for ca_block_forward_ndhwc.1']
    #allocation4 [shape = 's32[2]{0}', space=sflag, size = 0x8, scoped, tag = 'scoped memory for ca_block_forward_ndhwc.1']
    #allocation5 [shape = 'u8[131072]{0}', space=vmem, size = 0x20000, scoped, tag = 'output window, operand 0']
    %11 = vsyncpa [#allocation3], 0
    %s12 = scalar_lea.sflag [#allocation3], 1
    %13 = vsyncpa %s12, 0
    %14 = vsyncpa [#allocation4], 0
    %s15 = scalar_lea.sflag [#allocation4], 1
    %16 = vsyncpa %s15, 0
    loop: start=0, step=1, limit=4
    $region2: #{ca_block_forward_ndhwc.1} parent=1 // loop_pre_header
      _
    $region3: #{ca_block_forward_ndhwc.1} parent=1 // loop_header
      %s18 = sphi 0, %s22
      %p19 = scmp.ge.s32.totalorder %s18, 4
      %s28 = sphi 0, %s30
      %s31 = sphi 0, %s28
      %s32 = sphi 0, %s31
      %s48 = sphi 0, %s32
      %s52 = sphi 0, %s52
      %s54 = sphi 0, %s52
      %s55 = sphi 0, %s54
      %s69 = sphi 0, %s55
      %s73 = sphi 0, %s73
      %s75 = sphi 0, %s73
      %s76 = sphi 0, %s75
      %s90 = sphi 0, %s76
      %s94 = sphi 0, %s94
      %s96 = sphi 0, %s94
      %s97 = sphi 0, %s96
      %s111 = sphi 0, %s97
      %s115 = sphi 0, %s115
      %s117 = sphi 0, %s115
      %s118 = sphi 0, %s117
      %s132 = sphi 0, %s118
      %s136 = sphi 0, %s136
      %s138 = sphi 0, %s136
      %s139 = sphi 0, %s138
      %s153 = sphi 0, %s139
      %s159 = sphi 0, %s161
      %s162 = sphi 0, %s159
      %s163 = sphi 0, %s162
      %s179 = sphi 0, %s163
    $region4: #{ca_block_forward_ndhwc.1} parent=1 // loop_header_branch
      %21 = sbr.rel (%p19) target = $region8
    $region5: #{ca_block_forward_ndhwc.1} parent=1 // loop_body
      %s23 = ssub.s32 %s18, 1
      %s24 = ssub.s32 %s18, 2
      %s25 = sadd.s32 %s18, 1
      %s26 = ssub.s32 %s18, %s25
      %p27 = scmp.eq.s32.totalorder %s26, 0
      %s29 = sadd.s32 %s28, 1
      %s30 = scalar_select %p27, %s28, %s29
      %p33 = pneg %p27
      %p34 = scmp.eq.s32.totalorder %s18, 1
      %p35 = por %p33, %p34
      %p36 = scmp.ne.s32.totalorder %s28, %s31
      %p37 = scmp.eq.s32.totalorder %s18, 0
      %p38 = por %p36, %p37
      %p39 = scmp.ne.s32.totalorder %s28, %s31
      %p40 = scmp.eq.s32.totalorder %s23, 1
      %p41 = por %p39, %p40
      %p42 = scmp.ne.s32.totalorder %s31, %s32
      %p43 = scmp.eq.s32.totalorder %s23, 0
      %p44 = por %p42, %p43
      %p45 = scmp.ne.s32.totalorder %s31, %s32
      %p46 = scmp.eq.s32.totalorder %s24, 1
      %p47 = por %p45, %p46
      %p49 = scmp.ne.s32.totalorder %s32, %s48
      %p50 = scmp.eq.s32.totalorder %s24, 0
      %p51 = por %p49, %p50
      %s53 = sadd.s32 %s52, 1
      %p56 = scmp.eq.s32.totalorder %s18, 1
      %p57 = scmp.ne.s32.totalorder %s52, %s54
      %p58 = scmp.eq.s32.totalorder %s18, 0
      %p59 = por %p57, %p58
      %p60 = scmp.ne.s32.totalorder %s52, %s54
      %p61 = scmp.eq.s32.totalorder %s23, 1
      %p62 = por %p60, %p61
      %p63 = scmp.ne.s32.totalorder %s54, %s55
      %p64 = scmp.eq.s32.totalorder %s23, 0
      %p65 = por %p63, %p64
      %p66 = scmp.ne.s32.totalorder %s54, %s55
      %p67 = scmp.eq.s32.totalorder %s24, 1
      %p68 = por %p66, %p67
      %p70 = scmp.ne.s32.totalorder %s55, %s69
      %p71 = scmp.eq.s32.totalorder %s24, 0
      %p72 = por %p70, %p71
      %s74 = sadd.s32 %s73, 1
      %p77 = scmp.eq.s32.totalorder %s18, 1
      %p78 = scmp.ne.s32.totalorder %s73, %s75
      %p79 = scmp.eq.s32.totalorder %s18, 0
      %p80 = por %p78, %p79
      %p81 = scmp.ne.s32.totalorder %s73, %s75
      %p82 = scmp.eq.s32.totalorder %s23, 1
      %p83 = por %p81, %p82
      %p84 = scmp.ne.s32.totalorder %s75, %s76
      %p85 = scmp.eq.s32.totalorder %s23, 0
      %p86 = por %p84, %p85
      %p87 = scmp.ne.s32.totalorder %s75, %s76
      %p88 = scmp.eq.s32.totalorder %s24, 1
      %p89 = por %p87, %p88
      %p91 = scmp.ne.s32.totalorder %s76, %s90
      %p92 = scmp.eq.s32.totalorder %s24, 0
      %p93 = por %p91, %p92
      %s95 = sadd.s32 %s94, 1
      %p98 = scmp.eq.s32.totalorder %s18, 1
      %p99 = scmp.ne.s32.totalorder %s94, %s96
      %p100 = scmp.eq.s32.totalorder %s18, 0
      %p101 = por %p99, %p100
      %p102 = scmp.ne.s32.totalorder %s94, %s96
      %p103 = scmp.eq.s32.totalorder %s23, 1
      %p104 = por %p102, %p103
      %p105 = scmp.ne.s32.totalorder %s96, %s97
      %p106 = scmp.eq.s32.totalorder %s23, 0
      %p107 = por %p105, %p106
      %p108 = scmp.ne.s32.totalorder %s96, %s97
      %p109 = scmp.eq.s32.totalorder %s24, 1
      %p110 = por %p108, %p109
      %p112 = scmp.ne.s32.totalorder %s97, %s111
      %p113 = scmp.eq.s32.totalorder %s24, 0
      %p114 = por %p112, %p113
      %s116 = sadd.s32 %s115, 1
      %p119 = scmp.eq.s32.totalorder %s18, 1
      %p120 = scmp.ne.s32.totalorder %s115, %s117
      %p121 = scmp.eq.s32.totalorder %s18, 0
      %p122 = por %p120, %p121
      %p123 = scmp.ne.s32.totalorder %s115, %s117
      %p124 = scmp.eq.s32.totalorder %s23, 1
      %p125 = por %p123, %p124
      %p126 = scmp.ne.s32.totalorder %s117, %s118
      %p127 = scmp.eq.s32.totalorder %s23, 0
      %p128 = por %p126, %p127
      %p129 = scmp.ne.s32.totalorder %s117, %s118
      %p130 = scmp.eq.s32.totalorder %s24, 1
      %p131 = por %p129, %p130
      %p133 = scmp.ne.s32.totalorder %s118, %s132
      %p134 = scmp.eq.s32.totalorder %s24, 0
      %p135 = por %p133, %p134
      %s137 = sadd.s32 %s136, 1
      %p140 = scmp.eq.s32.totalorder %s18, 1
      %p141 = scmp.ne.s32.totalorder %s136, %s138
      %p142 = scmp.eq.s32.totalorder %s18, 0
      %p143 = por %p141, %p142
      %p144 = scmp.ne.s32.totalorder %s136, %s138
      %p145 = scmp.eq.s32.totalorder %s23, 1
      %p146 = por %p144, %p145
      %p147 = scmp.ne.s32.totalorder %s138, %s139
      %p148 = scmp.eq.s32.totalorder %s23, 0
      %p149 = por %p147, %p148
      %p150 = scmp.ne.s32.totalorder %s138, %s139
      %p151 = scmp.eq.s32.totalorder %s24, 1
      %p152 = por %p150, %p151
      %p154 = scmp.ne.s32.totalorder %s139, %s153
      %p155 = scmp.eq.s32.totalorder %s24, 0
      %p156 = por %p154, %p155
      %s157 = ssub.s32 %s18, %s25
      %p158 = scmp.eq.s32.totalorder %s157, 0
      %s160 = sadd.s32 %s159, 1
      %s161 = scalar_select %p158, %s159, %s160
      %p164 = pneg %p158
      %p165 = scmp.eq.s32.totalorder %s18, 1
      %p166 = por %p164, %p165
      %p167 = scmp.ne.s32.totalorder %s159, %s162
      %p168 = scmp.eq.s32.totalorder %s18, 0
      %p169 = por %p167, %p168
      %p170 = scmp.ne.s32.totalorder %s159, %s162
      %p171 = scmp.eq.s32.totalorder %s23, 1
      %p172 = por %p170, %p171
      %p173 = scmp.ne.s32.totalorder %s162, %s163
      %p174 = scmp.eq.s32.totalorder %s23, 0
      %p175 = por %p173, %p174
      %p176 = scmp.ne.s32.totalorder %s162, %s163
      %p177 = scmp.eq.s32.totalorder %s24, 1
      %p178 = por %p176, %p177
      %p180 = scmp.ne.s32.totalorder %s163, %s179
      %p181 = scmp.eq.s32.totalorder %s24, 0
      %p182 = por %p180, %p181
      %p183 = scmp.le.s32.totalorder 1, %s18
      %p184 = scmp.lt.s32.totalorder %s18, 3
      %p185 = pnand %p183, %p184
      %p186 = pneg %p185
      // Predicated region
      $region9: #{ca_block_forward_ndhwc.1} parent=5 // pred_check
        _
      $region10: #{ca_block_forward_ndhwc.1} parent=5 // pred_check_branch
        %188 = sbr.rel (%p185) target = $region12
      $region11: #{ca_block_forward_ndhwc.1} parent=5 // pred_region
        %s189 = ssub.s32 %s18, 1
        // Predicated region
        $region13: #{ca_block_forward_ndhwc.1} parent=11 // pred_check
          %p190 = pneg %p65
        $region14: #{ca_block_forward_ndhwc.1} parent=11 // pred_check_branch
          %192 = sbr.rel (%p190) target = $region16
        $region15: #{ca_block_forward_ndhwc.1} parent=11 // pred_region
          _
        $region16: #{ca_block_forward_ndhwc.1} parent=11 // pred_fallthru
          _
        // Predicated region
        $region17: #{ca_block_forward_ndhwc.1} parent=11 // pred_check
          %p193 = pneg %p86
        $region18: #{ca_block_forward_ndhwc.1} parent=11 // pred_check_branch
          %195 = sbr.rel (%p193) target = $region20
        $region19: #{ca_block_forward_ndhwc.1} parent=11 // pred_region
          _
        $region20: #{ca_block_forward_ndhwc.1} parent=11 // pred_fallthru
          _
        // Predicated region
        $region21: #{ca_block_forward_ndhwc.1} parent=11 // pred_check
          %p196 = pneg %p107
        $region22: #{ca_block_forward_ndhwc.1} parent=11 // pred_check_branch
          %198 = sbr.rel (%p196) target = $region24
        $region23: #{ca_block_forward_ndhwc.1} parent=11 // pred_region
          _
        $region24: #{ca_block_forward_ndhwc.1} parent=11 // pred_fallthru
          _
        // Predicated region
        $region25: #{ca_block_forward_ndhwc.1} parent=11 // pred_check
          %p199 = pneg %p128
        $region26: #{ca_block_forward_ndhwc.1} parent=11 // pred_check_branch
          %201 = sbr.rel (%p199) target = $region28
        $region27: #{ca_block_forward_ndhwc.1} parent=11 // pred_region
          _
        $region28: #{ca_block_forward_ndhwc.1} parent=11 // pred_fallthru
          _
        // Predicated region
        $region29: #{ca_block_forward_ndhwc.1} parent=11 // pred_check
          %p202 = pneg %p149
        $region30: #{ca_block_forward_ndhwc.1} parent=11 // pred_check_branch
          %204 = sbr.rel (%p202) target = $region32
        $region31: #{ca_block_forward_ndhwc.1} parent=11 // pred_region
          _
        $region32: #{ca_block_forward_ndhwc.1} parent=11 // pred_fallthru
          _
      $region12: #{ca_block_forward_ndhwc.1} parent=5 // pred_fallthru
        _
      %p205 = scmp.lt.s32.totalorder %s18, 2
      // Predicated region
      $region33: #{ca_block_forward_ndhwc.1} parent=5 // pred_check
        %p206 = pneg %p205
      $region34: #{ca_block_forward_ndhwc.1} parent=5 // pred_check_branch
        %208 = sbr.rel (%p206) target = $region36
      $region35: #{ca_block_forward_ndhwc.1} parent=5 // pred_region
        // Predicated region
        $region37: #{ca_block_forward_ndhwc.1} parent=35 // pred_check
          %p209 = pneg %p38
        $region38: #{ca_block_forward_ndhwc.1} parent=35 // pred_check_branch
          %211 = sbr.rel (%p209) target = $region40
        $region39: #{ca_block_forward_ndhwc.1} parent=35 // pred_region
          %s212 = sand.u32 %s28, 1
          %s213 = scalar_lea.sflag [#allocation3], %s212
          %s214 = sand.u32 %s28, 1
          %s215 = smul.addr %s214, 128
          %s216 = scalar_lea.vmem [#allocation2], %s215
          %s218 = ssub.s32 2048, 2048
          %219 = vsyncadd %s213, %s218
          %s220 = smul.addr %s18, 32
          %s221 = smul.addr %s220, 64
          %s222 = scalar_lea.hbm %s0, %s221
          %s223 = sshll.u32 %s216, 4
          %s224 = int_to_ptr.vmem [resolvable:$true] %s223
          %229 = dma.hbm_to_vmem [thread:$0]  %s222, 2048, %s224, %s213, 64, 64, 4
        $region40: #{ca_block_forward_ndhwc.1} parent=35 // pred_fallthru
          _
      $region36: #{ca_block_forward_ndhwc.1} parent=5 // pred_fallthru
        _
      %p230 = scmp.le.s32.totalorder 1, %s18
      %p231 = scmp.lt.s32.totalorder %s18, 3
      %p232 = pnand %p230, %p231
      %p233 = pneg %p232
      // Predicated region
      $region41: #{ca_block_forward_ndhwc.1} parent=5 // pred_check
        _
      $region42: #{ca_block_forward_ndhwc.1} parent=5 // pred_check_branch
        %235 = sbr.rel (%p232) target = $region44
      $region43: #{ca_block_forward_ndhwc.1} parent=5 // pred_region
        %s236 = ssub.s32 %s18, 1
        %s237 = sand.u32 %s31, 1
        %s238 = scalar_lea.sflag [#allocation3], %s237
        %s239 = sand.u32 %s31, 1
        %s240 = smul.addr %s239, 128
        %s241 = scalar_lea.vmem [#allocation2], %s240
        // Predicated region
        $region45: #{ca_block_forward_ndhwc.1} parent=43 // pred_check
          %p242 = pneg %p44
        $region46: #{ca_block_forward_ndhwc.1} parent=43 // pred_check_branch
          %244 = sbr.rel (%p242) target = $region48
        $region47: #{ca_block_forward_ndhwc.1} parent=43 // pred_region
          %245 = dma.done %s238, 2048
        $region48: #{ca_block_forward_ndhwc.1} parent=43 // pred_fallthru
          _
        %s246 = sand.u32 %s31, 1
        %s247 = scalar_lea.sflag [#allocation3], %s246
        %s248 = sand.u32 %s31, 1
        %s249 = smul.addr %s248, 128
        %s250 = scalar_lea.vmem [#allocation2], %s249
        %p251 = pneg %p44
        %p252 = pneg %p41
        %p253 = pneg %p65
        %p254 = pneg %p62
        %p255 = pneg %p86
        %p256 = pneg %p83
        %p257 = pneg %p107
        %p258 = pneg %p104
        %p259 = pneg %p128
        %p260 = pneg %p125
        %p261 = pneg %p149
        %p262 = pneg %p146
        %p263 = pneg %p175
        %p264 = pneg %p172
        %s265 = sand.u32 %s162, 1
        %s266 = scalar_lea.sflag [#allocation4], %s265
        %s267 = sand.u32 %s162, 1
        %s268 = smul.addr %s267, 128
        %s269 = scalar_lea.vmem [#allocation5], %s268
        %v271 = vld [vmem:[%s241] sm:$0xf]
        %v272 = vld [vmem:[%s241 + $0x4] sm:$0xf]
        %v273 = vld [vmem:[%s241 + $0x8] sm:$0xf]
        %v274 = vld [vmem:[%s241 + $0xc] sm:$0xf]
        %v275 = vld [vmem:[%s241 + $0x10] sm:$0xf]
        %v276 = vld [vmem:[%s241 + $0x14] sm:$0xf]
        %v277 = vld [vmem:[%s241 + $0x18] sm:$0xf]
        %v278 = vld [vmem:[%s241 + $0x1c] sm:$0xf]
        %v279 = vunpack.c.l.bf16 %v271
        %v280 = vunpack.c.l.bf16 %v272
        %v281 = vunpack.c.l.bf16 %v273
        %v282 = vunpack.c.l.bf16 %v274
        %v283 = vunpack.c.l.bf16 %v275
        %v284 = vunpack.c.l.bf16 %v276
        %v285 = vunpack.c.l.bf16 %v277
        %v286 = vunpack.c.l.bf16 %v278
        %v287 = vadd.f32 %v279, 0.0
        %v288 = vadd.f32 %v280, 0.0
        %v289 = vadd.f32 %v281, 0.0
        %v290 = vadd.f32 %v282, 0.0
        %v291 = vadd.f32 %v283, 0.0
        %v292 = vadd.f32 %v284, 0.0
        %v293 = vadd.f32 %v285, 0.0
        %v294 = vadd.f32 %v286, 0.0
        %v295 = vrot.slane %v279, 4
        %v296 = vadd.f32 %v279, %v295
        %v297 = vrot.slane %v296, 2
        %v298 = vadd.f32 %v296, %v297
        %v299 = vrot.slane %v298, 1
        %v300 = vadd.f32 %v298, %v299
        %v301 = vrot.slane %v280, 4
        %v302 = vadd.f32 %v280, %v301
        %v303 = vrot.slane %v302, 2
        %v304 = vadd.f32 %v302, %v303
        %v305 = vrot.slane %v304, 1
        %v306 = vadd.f32 %v304, %v305
        %v307 = vrot.slane %v281, 4
        %v308 = vadd.f32 %v281, %v307
        %v309 = vrot.slane %v308, 2
        %v310 = vadd.f32 %v308, %v309
        %v311 = vrot.slane %v310, 1
        %v312 = vadd.f32 %v310, %v311
        %v313 = vrot.slane %v282, 4
        %v314 = vadd.f32 %v282, %v313
        %v315 = vrot.slane %v314, 2
        %v316 = vadd.f32 %v314, %v315
        %v317 = vrot.slane %v316, 1
        %v318 = vadd.f32 %v316, %v317
        %v319 = vrot.slane %v283, 4
        %v320 = vadd.f32 %v283, %v319
        %v321 = vrot.slane %v320, 2
        %v322 = vadd.f32 %v320, %v321
        %v323 = vrot.slane %v322, 1
        %v324 = vadd.f32 %v322, %v323
        %v325 = vrot.slane %v284, 4
        %v326 = vadd.f32 %v284, %v325
        %v327 = vrot.slane %v326, 2
        %v328 = vadd.f32 %v326, %v327
        %v329 = vrot.slane %v328, 1
        %v330 = vadd.f32 %v328, %v329
        %v331 = vrot.slane %v285, 4
        %v332 = vadd.f32 %v285, %v331
        %v333 = vrot.slane %v332, 2
        %v334 = vadd.f32 %v332, %v333
        %v335 = vrot.slane %v334, 1
        %v336 = vadd.f32 %v334, %v335
        %v337 = vrot.slane %v286, 4
        %v338 = vadd.f32 %v286, %v337
        %v339 = vrot.slane %v338, 2
        %v340 = vadd.f32 %v338, %v339
        %v341 = vrot.slane %v340, 1
        %v342 = vadd.f32 %v340, %v341
        %v343 = vrcp.pop 8.0
        %v344 = vmul.f32 %v300, %v343
        %v345 = vmul.f32 %v306, %v343
        %v346 = vmul.f32 %v312, %v343
        %v347 = vmul.f32 %v318, %v343
        %v348 = vmul.f32 %v324, %v343
        %v349 = vmul.f32 %v330, %v343
        %v350 = vmul.f32 %v336, %v343
        %v351 = vmul.f32 %v342, %v343
        %v352 = vadd.f32 %v279, %v280
        %v353 = vadd.f32 %v352, %v281
        %v354 = vadd.f32 %v353, %v282
        %v355 = vadd.f32 %v354, %v283
        %v356 = vadd.f32 %v355, %v284
        %v357 = vadd.f32 %v356, %v285
        %v358 = vadd.f32 %v357, %v286
        %v359 = vmul.f32 %v358, %v343
        %s360 = scalar_lea.vmem %s241, 32 [#allocation2]
        %v361 = vld [vmem:[%s360] sm:$0xf]
        %v362 = vld [vmem:[%s360 + $0x4] sm:$0xf]
        %v363 = vld [vmem:[%s360 + $0x8] sm:$0xf]
        %v364 = vld [vmem:[%s360 + $0xc] sm:$0xf]
        %v365 = vld [vmem:[%s360 + $0x10] sm:$0xf]
        %v366 = vld [vmem:[%s360 + $0x14] sm:$0xf]
        %v367 = vld [vmem:[%s360 + $0x18] sm:$0xf]
        %v368 = vld [vmem:[%s360 + $0x1c] sm:$0xf]
        %v369 = vunpack.c.l.bf16 %v361
        %v370 = vunpack.c.l.bf16 %v362
        %v371 = vunpack.c.l.bf16 %v363
        %v372 = vunpack.c.l.bf16 %v364
        %v373 = vunpack.c.l.bf16 %v365
        %v374 = vunpack.c.l.bf16 %v366
        %v375 = vunpack.c.l.bf16 %v367
        %v376 = vunpack.c.l.bf16 %v368
        %v377 = vadd.f32 %v287, %v369
        %v378 = vadd.f32 %v288, %v370
        %v379 = vadd.f32 %v289, %v371
        %v380 = vadd.f32 %v290, %v372
        %v381 = vadd.f32 %v291, %v373
        %v382 = vadd.f32 %v292, %v374
        %v383 = vadd.f32 %v293, %v375
        %v384 = vadd.f32 %v294, %v376
        %v385 = vrot.slane %v369, 4
        %v386 = vadd.f32 %v369, %v385
        %v387 = vrot.slane %v386, 2
        %v388 = vadd.f32 %v386, %v387
        %v389 = vrot.slane %v388, 1
        %v390 = vadd.f32 %v388, %v389
        %v391 = vrot.slane %v370, 4
        %v392 = vadd.f32 %v370, %v391
        %v393 = vrot.slane %v392, 2
        %v394 = vadd.f32 %v392, %v393
        %v395 = vrot.slane %v394, 1
        %v396 = vadd.f32 %v394, %v395
        %v397 = vrot.slane %v371, 4
        %v398 = vadd.f32 %v371, %v397
        %v399 = vrot.slane %v398, 2
        %v400 = vadd.f32 %v398, %v399
        %v401 = vrot.slane %v400, 1
        %v402 = vadd.f32 %v400, %v401
        %v403 = vrot.slane %v372, 4
        %v404 = vadd.f32 %v372, %v403
        %v405 = vrot.slane %v404, 2
        %v406 = vadd.f32 %v404, %v405
        %v407 = vrot.slane %v406, 1
        %v408 = vadd.f32 %v406, %v407
        %v409 = vrot.slane %v373, 4
        %v410 = vadd.f32 %v373, %v409
        %v411 = vrot.slane %v410, 2
        %v412 = vadd.f32 %v410, %v411
        %v413 = vrot.slane %v412, 1
        %v414 = vadd.f32 %v412, %v413
        %v415 = vrot.slane %v374, 4
        %v416 = vadd.f32 %v374, %v415
        %v417 = vrot.slane %v416, 2
        %v418 = vadd.f32 %v416, %v417
        %v419 = vrot.slane %v418, 1
        %v420 = vadd.f32 %v418, %v419
        %v421 = vrot.slane %v375, 4
        %v422 = vadd.f32 %v375, %v421
        %v423 = vrot.slane %v422, 2
        %v424 = vadd.f32 %v422, %v423
        %v425 = vrot.slane %v424, 1
        %v426 = vadd.f32 %v424, %v425
        %v427 = vrot.slane %v376, 4
        %v428 = vadd.f32 %v376, %v427
        %v429 = vrot.slane %v428, 2
        %v430 = vadd.f32 %v428, %v429
        %v431 = vrot.slane %v430, 1
        %v432 = vadd.f32 %v430, %v431
        %v433 = vmul.f32 %v390, %v343
        %v434 = vmul.f32 %v396, %v343
        %v435 = vmul.f32 %v402, %v343
        %v436 = vmul.f32 %v408, %v343
        %v437 = vmul.f32 %v414, %v343
        %v438 = vmul.f32 %v420, %v343
        %v439 = vmul.f32 %v426, %v343
        %v440 = vmul.f32 %v432, %v343
        %v441 = vadd.f32 %v369, %v370
        %v442 = vadd.f32 %v441, %v371
        %v443 = vadd.f32 %v442, %v372
        %v444 = vadd.f32 %v443, %v373
        %v445 = vadd.f32 %v444, %v374
        %v446 = vadd.f32 %v445, %v375
        %v447 = vadd.f32 %v446, %v376
        %v448 = vmul.f32 %v447, %v343
        %s449 = scalar_lea.vmem %s241, 64 [#allocation2]
        %v450 = vld [vmem:[%s449] sm:$0xf]
        %v451 = vld [vmem:[%s449 + $0x4] sm:$0xf]
        %v452 = vld [vmem:[%s449 + $0x8] sm:$0xf]
        %v453 = vld [vmem:[%s449 + $0xc] sm:$0xf]
        %v454 = vld [vmem:[%s449 + $0x10] sm:$0xf]
        %v455 = vld [vmem:[%s449 + $0x14] sm:$0xf]
        %v456 = vld [vmem:[%s449 + $0x18] sm:$0xf]
        %v457 = vld [vmem:[%s449 + $0x1c] sm:$0xf]
        %v458 = vunpack.c.l.bf16 %v450
        %v459 = vunpack.c.l.bf16 %v451
        %v460 = vunpack.c.l.bf16 %v452
        %v461 = vunpack.c.l.bf16 %v453
        %v462 = vunpack.c.l.bf16 %v454
        %v463 = vunpack.c.l.bf16 %v455
        %v464 = vunpack.c.l.bf16 %v456
        %v465 = vunpack.c.l.bf16 %v457
        %v466 = vadd.f32 %v377, %v458
        %v467 = vadd.f32 %v378, %v459
        %v468 = vadd.f32 %v379, %v460
        %v469 = vadd.f32 %v380, %v461
        %v470 = vadd.f32 %v381, %v462
        %v471 = vadd.f32 %v382, %v463
        %v472 = vadd.f32 %v383, %v464
        %v473 = vadd.f32 %v384, %v465
        %v474 = vrot.slane %v458, 4
        %v475 = vadd.f32 %v458, %v474
        %v476 = vrot.slane %v475, 2
        %v477 = vadd.f32 %v475, %v476
        %v478 = vrot.slane %v477, 1
        %v479 = vadd.f32 %v477, %v478
        %v480 = vrot.slane %v459, 4
        %v481 = vadd.f32 %v459, %v480
        %v482 = vrot.slane %v481, 2
        %v483 = vadd.f32 %v481, %v482
        %v484 = vrot.slane %v483, 1
        %v485 = vadd.f32 %v483, %v484
        %v486 = vrot.slane %v460, 4
        %v487 = vadd.f32 %v460, %v486
        %v488 = vrot.slane %v487, 2
        %v489 = vadd.f32 %v487, %v488
        %v490 = vrot.slane %v489, 1
        %v491 = vadd.f32 %v489, %v490
        %v492 = vrot.slane %v461, 4
        %v493 = vadd.f32 %v461, %v492
        %v494 = vrot.slane %v493, 2
        %v495 = vadd.f32 %v493, %v494
        %v496 = vrot.slane %v495, 1
        %v497 = vadd.f32 %v495, %v496
        %v498 = vrot.slane %v462, 4
        %v499 = vadd.f32 %v462, %v498
        %v500 = vrot.slane %v499, 2
        %v501 = vadd.f32 %v499, %v500
        %v502 = vrot.slane %v501, 1
        %v503 = vadd.f32 %v501, %v502
        %v504 = vrot.slane %v463, 4
        %v505 = vadd.f32 %v463, %v504
        %v506 = vrot.slane %v505, 2
        %v507 = vadd.f32 %v505, %v506
        %v508 = vrot.slane %v507, 1
        %v509 = vadd.f32 %v507, %v508
        %v510 = vrot.slane %v464, 4
        %v511 = vadd.f32 %v464, %v510
        %v512 = vrot.slane %v511, 2
        %v513 = vadd.f32 %v511, %v512
        %v514 = vrot.slane %v513, 1
        %v515 = vadd.f32 %v513, %v514
        %v516 = vrot.slane %v465, 4
        %v517 = vadd.f32 %v465, %v516
        %v518 = vrot.slane %v517, 2
        %v519 = vadd.f32 %v517, %v518
        %v520 = vrot.slane %v519, 1
        %v521 = vadd.f32 %v519, %v520
        %v522 = vmul.f32 %v479, %v343
        %v523 = vmul.f32 %v485, %v343
        %v524 = vmul.f32 %v491, %v343
        %v525 = vmul.f32 %v497, %v343
        %v526 = vmul.f32 %v503, %v343
        %v527 = vmul.f32 %v509, %v343
        %v528 = vmul.f32 %v515, %v343
        %v529 = vmul.f32 %v521, %v343
        %v530 = vadd.f32 %v458, %v459
        %v531 = vadd.f32 %v530, %v460
        %v532 = vadd.f32 %v531, %v461
        %v533 = vadd.f32 %v532, %v462
        %v534 = vadd.f32 %v533, %v463
        %v535 = vadd.f32 %v534, %v464
        %v536 = vadd.f32 %v535, %v465
        %v537 = vmul.f32 %v536, %v343
        %s538 = scalar_lea.vmem %s241, 96 [#allocation2]
        %v539 = vld [vmem:[%s538] sm:$0xf]
        %v540 = vld [vmem:[%s538 + $0x4] sm:$0xf]
        %v541 = vld [vmem:[%s538 + $0x8] sm:$0xf]
        %v542 = vld [vmem:[%s538 + $0xc] sm:$0xf]
        %v543 = vld [vmem:[%s538 + $0x10] sm:$0xf]
        %v544 = vld [vmem:[%s538 + $0x14] sm:$0xf]
        %v545 = vld [vmem:[%s538 + $0x18] sm:$0xf]
        %v546 = vld [vmem:[%s538 + $0x1c] sm:$0xf]
        %v547 = vunpack.c.l.bf16 %v539
        %v548 = vunpack.c.l.bf16 %v540
        %v549 = vunpack.c.l.bf16 %v541
        %v550 = vunpack.c.l.bf16 %v542
        %v551 = vunpack.c.l.bf16 %v543
        %v552 = vunpack.c.l.bf16 %v544
        %v553 = vunpack.c.l.bf16 %v545
        %v554 = vunpack.c.l.bf16 %v546
        %v555 = vadd.f32 %v466, %v547
        %v556 = vadd.f32 %v467, %v548
        %v557 = vadd.f32 %v468, %v549
        %v558 = vadd.f32 %v469, %v550
        %v559 = vadd.f32 %v470, %v551
        %v560 = vadd.f32 %v471, %v552
        %v561 = vadd.f32 %v472, %v553
        %v562 = vadd.f32 %v473, %v554
        %v563 = vrot.slane %v547, 4
        %v564 = vadd.f32 %v547, %v563
        %v565 = vrot.slane %v564, 2
        %v566 = vadd.f32 %v564, %v565
        %v567 = vrot.slane %v566, 1
        %v568 = vadd.f32 %v566, %v567
        %v569 = vrot.slane %v548, 4
        %v570 = vadd.f32 %v548, %v569
        %v571 = vrot.slane %v570, 2
        %v572 = vadd.f32 %v570, %v571
        %v573 = vrot.slane %v572, 1
        %v574 = vadd.f32 %v572, %v573
        %v575 = vrot.slane %v549, 4
        %v576 = vadd.f32 %v549, %v575
        %v577 = vrot.slane %v576, 2
        %v578 = vadd.f32 %v576, %v577
        %v579 = vrot.slane %v578, 1
        %v580 = vadd.f32 %v578, %v579
        %v581 = vrot.slane %v550, 4
        %v582 = vadd.f32 %v550, %v581
        %v583 = vrot.slane %v582, 2
        %v584 = vadd.f32 %v582, %v583
        %v585 = vrot.slane %v584, 1
        %v586 = vadd.f32 %v584, %v585
        %v587 = vrot.slane %v551, 4
        %v588 = vadd.f32 %v551, %v587
        %v589 = vrot.slane %v588, 2
        %v590 = vadd.f32 %v588, %v589
        %v591 = vrot.slane %v590, 1
        %v592 = vadd.f32 %v590, %v591
        %v593 = vrot.slane %v552, 4
        %v594 = vadd.f32 %v552, %v593
        %v595 = vrot.slane %v594, 2
        %v596 = vadd.f32 %v594, %v595
        %v597 = vrot.slane %v596, 1
        %v598 = vadd.f32 %v596, %v597
        %v599 = vrot.slane %v553, 4
        %v600 = vadd.f32 %v553, %v599
        %v601 = vrot.slane %v600, 2
        %v602 = vadd.f32 %v600, %v601
        %v603 = vrot.slane %v602, 1
        %v604 = vadd.f32 %v602, %v603
        %v605 = vrot.slane %v554, 4
        %v606 = vadd.f32 %v554, %v605
        %v607 = vrot.slane %v606, 2
        %v608 = vadd.f32 %v606, %v607
        %v609 = vrot.slane %v608, 1
        %v610 = vadd.f32 %v608, %v609
        %v611 = vmul.f32 %v568, %v343
        %v612 = vmul.f32 %v574, %v343
        %v613 = vmul.f32 %v580, %v343
        %v614 = vmul.f32 %v586, %v343
        %v615 = vmul.f32 %v592, %v343
        %v616 = vmul.f32 %v598, %v343
        %v617 = vmul.f32 %v604, %v343
        %v618 = vmul.f32 %v610, %v343
        %v619 = vadd.f32 %v547, %v548
        %v620 = vadd.f32 %v619, %v549
        %v621 = vadd.f32 %v620, %v550
        %v622 = vadd.f32 %v621, %v551
        %v623 = vadd.f32 %v622, %v552
        %v624 = vadd.f32 %v623, %v553
        %v625 = vadd.f32 %v624, %v554
        %v626 = vmul.f32 %v625, %v343
        %v627 = vmul.f32 %v555, 0.25
        %v628 = vmul.f32 %v556, 0.25
        %v629 = vmul.f32 %v557, 0.25
        %v630 = vmul.f32 %v558, 0.25
        %v631 = vmul.f32 %v559, 0.25
        %v632 = vmul.f32 %v560, 0.25
        %v633 = vmul.f32 %v561, 0.25
        %v634 = vmul.f32 %v562, 0.25
        %vm643 = vcmask 1041409
        %v644 = vsel %vm643, %v345, %v344
        %vm645 = vcmask 1042434
        %v646 = vsel %vm645, %v346, %v644
        %vm647 = vcmask 1043459
        %v648 = vsel %vm647, %v347, %v646
        %vm649 = vcmask 1044484
        %v650 = vsel %vm649, %v348, %v648
        %vm651 = vcmask 1045509
        %v652 = vsel %vm651, %v349, %v650
        %vm653 = vcmask 1046534
        %v654 = vsel %vm653, %v350, %v652
        %vm655 = vcmask 1047559
        %v656 = vsel %vm655, %v351, %v654
        %v666 = vsel %vm643, %v434, %v433
        %v667 = vsel %vm645, %v435, %v666
        %v668 = vsel %vm647, %v436, %v667
        %v669 = vsel %vm649, %v437, %v668
        %v670 = vsel %vm651, %v438, %v669
        %v671 = vsel %vm653, %v439, %v670
        %v672 = vsel %vm655, %v440, %v671
        %v682 = vsel %vm643, %v523, %v522
        %v683 = vsel %vm645, %v524, %v682
        %v684 = vsel %vm647, %v525, %v683
        %v685 = vsel %vm649, %v526, %v684
        %v686 = vsel %vm651, %v527, %v685
        %v687 = vsel %vm653, %v528, %v686
        %v688 = vsel %vm655, %v529, %v687
        %v698 = vsel %vm643, %v612, %v611
        %v699 = vsel %vm645, %v613, %v698
        %v700 = vsel %vm647, %v614, %v699
        %v701 = vsel %vm649, %v615, %v700
        %v702 = vsel %vm651, %v616, %v701
        %v703 = vsel %vm653, %v617, %v702
        %v704 = vsel %vm655, %v618, %v703
        %v706 = vpack.c.bf16 %v628, %v627
        %v707 = vpack.c.bf16 %v630, %v629
        %v708 = vpack.c.bf16 %v632, %v631
        %v709 = vpack.c.bf16 %v634, %v633
        %v710 = vpack.c.bf16 %v672, %v656
        %v711 = vpack.c.bf16 %v704, %v688
        %v712 = vpack.c.bf16 %v448, %v359
        %v713 = vpack.c.bf16 %v626, %v537
        %v714 = vld [vmem:[%s1] sm:$0xf]
        %v715 = vld [vmem:[%s1 + $0x4] sm:$0xf]
        %v716 = vld [vmem:[%s1 + $0x8] sm:$0xf]
        %v717 = vld [vmem:[%s1 + $0xc] sm:$0xf]
        %v718 = vld [vmem:[%s1 + $0x10] sm:$0xf]
        %v719 = vld [vmem:[%s1 + $0x14] sm:$0xf]
        %v720 = vld [vmem:[%s1 + $0x18] sm:$0xf]
        %v721 = vld [vmem:[%s1 + $0x1c] sm:$0xf]
        %v722 = vld [vmem:[%s1 + $0x20] sm:$0xf]
        %v723 = vld [vmem:[%s1 + $0x24] sm:$0xf]
        %v724 = vld [vmem:[%s1 + $0x28] sm:$0xf]
        %v725 = vld [vmem:[%s1 + $0x2c] sm:$0xf]
        %v726 = vld [vmem:[%s1 + $0x30] sm:$0xf]
        %v727 = vld [vmem:[%s1 + $0x34] sm:$0xf]
        %v728 = vld [vmem:[%s1 + $0x38] sm:$0xf]
        %v729 = vld [vmem:[%s1 + $0x3c] sm:$0xf]
        %v730 = vld [vmem:[%s2] sm:$0x1]
        %v732 = vlaneseq
        %v733 = vshrl.u32 %v732, 7
        %v734 = vsub.s32 0, %v733
        %v735 = vrot.slane %v730, %v734
        %v753 = vunpack.c.l.b16 %v714
        %v754 = vunpack.c.l.b16 %v715
        %v755 = vunpack.c.l.b16 %v716
        %v756 = vunpack.c.l.b16 %v717
        %v757 = vunpack.c.l.b16 %v718
        %v758 = vunpack.c.l.b16 %v719
        %v759 = vunpack.c.l.b16 %v720
        %v760 = vunpack.c.l.b16 %v721
        %v761 = vunpack.c.l.b16 %v722
        %v762 = vunpack.c.l.b16 %v723
        %v763 = vunpack.c.l.b16 %v724
        %v764 = vunpack.c.l.b16 %v725
        %v765 = vunpack.c.l.b16 %v726
        %v766 = vunpack.c.l.b16 %v727
        %v767 = vunpack.c.l.b16 %v728
        %v768 = vunpack.c.l.b16 %v729
        %v769 = vpack.c.b16 %v754, %v753
        %v770 = vpack.c.b16 %v756, %v755
        %v771 = vpack.c.b16 %v758, %v757
        %v772 = vpack.c.b16 %v760, %v759
        %v773 = vpack.c.b16 %v762, %v761
        %v774 = vpack.c.b16 %v764, %v763
        %v775 = vpack.c.b16 %v766, %v765
        %v776 = vpack.c.b16 %v768, %v767
        %785 = vmatprep.subr.bf16.mxu0 0
        %786 = vmatpush1.bf16.msra.mxu0 %v769
        %787 = vmatprep.subr.bf16.mxu0 0
        %788 = vmatpush1.bf16.msra.mxu0 %v770
        %789 = vmatprep.subr.bf16.mxu0 0
        %790 = vmatpush1.bf16.msra.mxu0 %v771
        %791 = vmatprep.subr.bf16.mxu0 0
        %792 = vmatpush1.bf16.msra.mxu0 %v772
        %793 = vmatprep.subr.bf16.mxu0 0
        %794 = vmatpush1.bf16.msra.mxu0 %v773
        %795 = vmatprep.subr.bf16.mxu0 0
        %796 = vmatpush1.bf16.msra.mxu0 %v774
        %797 = vmatprep.subr.bf16.mxu0 0
        %798 = vmatpush1.bf16.msra.mxu0 %v775
        %799 = vmatprep.subr.bf16.mxu0 0
        %800 = vmatpush1.bf16.msra.mxu0 %v776
        %801 = vmatprep.subr.bf16.mxu0 0
        %802 = vmatpush1.bf16.msra.mxu0 0
        %803 = vmatprep.subr.bf16.mxu0 0
        %804 = vmatpush1.bf16.msra.mxu0 0
        %805 = vmatprep.subr.bf16.mxu0 0
        %806 = vmatpush1.bf16.msra.mxu0 0
        %807 = vmatprep.subr.bf16.mxu0 0
        %808 = vmatpush1.bf16.msra.mxu0 0
        %809 = vmatprep.subr.bf16.mxu0 0
        %810 = vmatpush1.bf16.msra.mxu0 0
        %811 = vmatprep.subr.bf16.mxu0 0
        %812 = vmatpush1.bf16.msra.mxu0 0
        %813 = vmatprep.subr.bf16.mxu0 0
        %814 = vmatpush1.bf16.msra.mxu0 0
        %815 = vmatprep.subr.bf16.mxu0 0
        %816 = vmatpush1.bf16.msra.mxu0 0
        %817 = vmatprep.mubr.bf16.mxu0 0
        %818 = vmatmul.mubr.bf16.gmra.mrb[0].mxu0 %v706
        %v819 = vpop.f32.mrb[0].mxu0
        %v820 = vadd.f32 %v735, %v819
        %v821 = vpop.f32.mrb[0].mxu0
        %v822 = vpop.f32.mrb[0].mxu0
        %v823 = vadd.f32 %v735, %v822
        %v824 = vpop.f32.mrb[0].mxu0
        %825 = vmatprep.mubr.bf16.mxu0 0
        %826 = vmatmul.mubr.bf16.gmra.mrb[0].mxu0 %v707
        %v827 = vpop.f32.mrb[0].mxu0
        %v828 = vadd.f32 %v735, %v827
        %v829 = vpop.f32.mrb[0].mxu0
        %v830 = vpop.f32.mrb[0].mxu0
        %v831 = vadd.f32 %v735, %v830
        %v832 = vpop.f32.mrb[0].mxu0
        %833 = vmatprep.mubr.bf16.mxu0 0
        %834 = vmatmul.mubr.bf16.gmra.mrb[0].mxu0 %v708
        %v835 = vpop.f32.mrb[0].mxu0
        %v836 = vadd.f32 %v735, %v835
        %v837 = vpop.f32.mrb[0].mxu0
        %v838 = vpop.f32.mrb[0].mxu0
        %v839 = vadd.f32 %v735, %v838
        %v840 = vpop.f32.mrb[0].mxu0
        %841 = vmatprep.mubr.bf16.mxu0 0
        %842 = vmatmul.mubr.bf16.gmra.mrb[0].mxu0 %v709
        %v843 = vpop.f32.mrb[0].mxu0
        %v844 = vadd.f32 %v735, %v843
        %v845 = vpop.f32.mrb[0].mxu0
        %v846 = vpop.f32.mrb[0].mxu0
        %v847 = vadd.f32 %v735, %v846
        %v848 = vpop.f32.mrb[0].mxu0
        %849 = vmatprep.mubr.bf16.mxu0 0
        %850 = vmatmul.mubr.bf16.gmra.mrb[0].mxu0 %v710
        %v851 = vpop.f32.mrb[0].mxu0
        %v852 = vadd.f32 %v735, %v851
        %v853 = vpop.f32.mrb[0].mxu0
        %v854 = vpop.f32.mrb[0].mxu0
        %v855 = vadd.f32 %v735, %v854
        %v856 = vpop.f32.mrb[0].mxu0
        %857 = vmatprep.mubr.bf16.mxu0 0
        %858 = vmatmul.mubr.bf16.gmra.mrb[0].mxu0 %v711
        %v859 = vpop.f32.mrb[0].mxu0
        %v860 = vadd.f32 %v735, %v859
        %v861 = vpop.f32.mrb[0].mxu0
        %v862 = vpop.f32.mrb[0].mxu0
        %v863 = vadd.f32 %v735, %v862
        %v864 = vpop.f32.mrb[0].mxu0
        %865 = vmatprep.mubr.bf16.mxu0 0
        %866 = vmatmul.mubr.bf16.gmra.mrb[0].mxu0 %v712
        %v867 = vpop.f32.mrb[0].mxu0
        %v868 = vadd.f32 %v735, %v867
        %v869 = vpop.f32.mrb[0].mxu0
        %v870 = vpop.f32.mrb[0].mxu0
        %v871 = vadd.f32 %v735, %v870
        %v872 = vpop.f32.mrb[0].mxu0
        %873 = vmatprep.mubr.bf16.mxu0 0
        %874 = vmatmul.mubr.bf16.gmra.mrb[0].mxu0 %v713
        %v875 = vpop.f32.mrb[0].mxu0
        %v876 = vadd.f32 %v735, %v875
        %v877 = vpop.f32.mrb[0].mxu0
        %v878 = vpop.f32.mrb[0].mxu0
        %v879 = vadd.f32 %v735, %v878
        %v880 = vpop.f32.mrb[0].mxu0
        %881 = vdwg.mxu0
        %v882 = vmax.f32 %v820, 0.0
        %v883 = vmax.f32 %v823, 0.0
        %v884 = vmax.f32 %v828, 0.0
        %v885 = vmax.f32 %v831, 0.0
        %v886 = vmax.f32 %v836, 0.0
        %v887 = vmax.f32 %v839, 0.0
        %v888 = vmax.f32 %v844, 0.0
        %v889 = vmax.f32 %v847, 0.0
        %v890 = vmax.f32 %v852, 0.0
        %v891 = vmax.f32 %v855, 0.0
        %v892 = vmax.f32 %v860, 0.0
        %v893 = vmax.f32 %v863, 0.0
        %v894 = vmax.f32 %v868, 0.0
        %v895 = vmax.f32 %v871, 0.0
        %v896 = vmax.f32 %v876, 0.0
        %v897 = vmax.f32 %v879, 0.0
        %v898 = vpack.c.bf16 %v883, %v882
        %v899 = vpack.c.bf16 %v885, %v884
        %v900 = vpack.c.bf16 %v887, %v886
        %v901 = vpack.c.bf16 %v889, %v888
        %v902 = vpack.c.bf16 %v891, %v890
        %v903 = vpack.c.bf16 %v893, %v892
        %v904 = vpack.c.bf16 %v895, %v894
        %v905 = vpack.c.bf16 %v897, %v896
        %v906 = vld [vmem:[%s3] sm:$0xf]
        %vm907 = vcmask 64512
        %v909 = vsel %vm907, %v898, 0
        %v912 = vsel %vm907, %v899, 0
        %v915 = vsel %vm907, %v900, 0
        %v918 = vsel %vm907, %v901, 0
        %vm920 = vcmask 1043456
        %v922 = vsel %vm920, %v906, 0
        %924 = vmatprep.subr.bf16.mxu0 0
        %925 = vmatpush1.bf16.msra.mxu0 %v922
        %926 = vmatprep.subr.bf16.mxu0 0
        %927 = vmatpush1.bf16.msra.mxu0 0
        %928 = vmatprep.subr.bf16.mxu0 0
        %929 = vmatpush1.bf16.msra.mxu0 0
        %930 = vmatprep.subr.bf16.mxu0 0
        %931 = vmatpush1.bf16.msra.mxu0 0
        %932 = vmatprep.subr.bf16.mxu0 0
        %933 = vmatpush1.bf16.msra.mxu0 0
        %934 = vmatprep.subr.bf16.mxu0 0
        %935 = vmatpush1.bf16.msra.mxu0 0
        %936 = vmatprep.subr.bf16.mxu0 0
        %937 = vmatpush1.bf16.msra.mxu0 0
        %938 = vmatprep.subr.bf16.mxu0 0
        %939 = vmatpush1.bf16.msra.mxu0 0
        %940 = vmatprep.subr.bf16.mxu0 0
        %941 = vmatpush1.bf16.msra.mxu0 0
        %942 = vmatprep.subr.bf16.mxu0 0
        %943 = vmatpush1.bf16.msra.mxu0 0
        %944 = vmatprep.subr.bf16.mxu0 0
        %945 = vmatpush1.bf16.msra.mxu0 0
        %946 = vmatprep.subr.bf16.mxu0 0
        %947 = vmatpush1.bf16.msra.mxu0 0
        %948 = vmatprep.subr.bf16.mxu0 0
        %949 = vmatpush1.bf16.msra.mxu0 0
        %950 = vmatprep.subr.bf16.mxu0 0
        %951 = vmatpush1.bf16.msra.mxu0 0
        %952 = vmatprep.subr.bf16.mxu0 0
        %953 = vmatpush1.bf16.msra.mxu0 0
        %954 = vmatprep.subr.bf16.mxu0 0
        %955 = vmatpush1.bf16.msra.mxu0 0
        %956 = vmatprep.mubr.bf16.mxu0 0
        %957 = vmatmul.mubr.bf16.gmra.mrb[0].mxu0 %v909
        %v958 = vpop.f32.mrb[0].mxu0
        %v959 = vadd.f32 0.0, %v958
        %v960 = vpop.f32.mrb[0].mxu0
        %v961 = vpop.f32.mrb[0].mxu0
        %v962 = vadd.f32 0.0, %v961
        %v963 = vpop.f32.mrb[0].mxu0
        %964 = vmatprep.mubr.bf16.mxu0 0
        %965 = vmatmul.mubr.bf16.gmra.mrb[0].mxu0 %v912
        %v966 = vpop.f32.mrb[0].mxu0
        %v967 = vadd.f32 0.0, %v966
        %v968 = vpop.f32.mrb[0].mxu0
        %v969 = vpop.f32.mrb[0].mxu0
        %v970 = vadd.f32 0.0, %v969
        %v971 = vpop.f32.mrb[0].mxu0
        %972 = vmatprep.mubr.bf16.mxu0 0
        %973 = vmatmul.mubr.bf16.gmra.mrb[0].mxu0 %v915
        %v974 = vpop.f32.mrb[0].mxu0
        %v975 = vadd.f32 0.0, %v974
        %v976 = vpop.f32.mrb[0].mxu0
        %v977 = vpop.f32.mrb[0].mxu0
        %v978 = vadd.f32 0.0, %v977
        %v979 = vpop.f32.mrb[0].mxu0
        %980 = vmatprep.mubr.bf16.mxu0 0
        %981 = vmatmul.mubr.bf16.gmra.mrb[0].mxu0 %v918
        %v982 = vpop.f32.mrb[0].mxu0
        %v983 = vadd.f32 0.0, %v982
        %v984 = vpop.f32.mrb[0].mxu0
        %v985 = vpop.f32.mrb[0].mxu0
        %v986 = vadd.f32 0.0, %v985
        %v987 = vpop.f32.mrb[0].mxu0
        %988 = vdwg.mxu0
        %v989 = vsub.f32 0.0, %v959
        %v990 = vsub.f32 0.0, %v962
        %v991 = vsub.f32 0.0, %v967
        %v992 = vsub.f32 0.0, %v970
        %v993 = vsub.f32 0.0, %v975
        %v994 = vsub.f32 0.0, %v978
        %v995 = vsub.f32 0.0, %v983
        %v996 = vsub.f32 0.0, %v986
        %v997 = vmul.f32 %v989, 1.442695
        %v998 = vpow.pop %v997
        %v999 = vmul.f32 %v990, 1.442695
        %v1000 = vpow.pop %v999
        %v1001 = vmul.f32 %v991, 1.442695
        %v1002 = vpow.pop %v1001
        %v1003 = vmul.f32 %v992, 1.442695
        %v1004 = vpow.pop %v1003
        %v1005 = vmul.f32 %v993, 1.442695
        %v1006 = vpow.pop %v1005
        %v1007 = vmul.f32 %v994, 1.442695
        %v1008 = vpow.pop %v1007
        %v1009 = vmul.f32 %v995, 1.442695
        %v1010 = vpow.pop %v1009
        %v1011 = vmul.f32 %v996, 1.442695
        %v1012 = vpow.pop %v1011
        %v1013 = vadd.f32 %v998, 1.0
        %v1014 = vadd.f32 %v1000, 1.0
        %v1015 = vadd.f32 %v1002, 1.0
        %v1016 = vadd.f32 %v1004, 1.0
        %v1017 = vadd.f32 %v1006, 1.0
        %v1018 = vadd.f32 %v1008, 1.0
        %v1019 = vadd.f32 %v1010, 1.0
        %v1020 = vadd.f32 %v1012, 1.0
        %v1021 = vrcp.pop %v1013
        %v1022 = vrcp.pop %v1014
        %v1023 = vrcp.pop %v1015
        %v1024 = vrcp.pop %v1016
        %v1025 = vrcp.pop %v1017
        %v1026 = vrcp.pop %v1018
        %v1027 = vrcp.pop %v1019
        %v1028 = vrcp.pop %v1020
        %v1029 = vld [vmem:[%s4] sm:$0xf]
        %v1031 = vsel %vm907, %v902, 0
        %v1034 = vsel %vm907, %v903, 0
        %v1037 = vsel %vm920, %v1029, 0
        %1039 = vmatprep.subr.bf16.mxu0 0
        %1040 = vmatpush1.bf16.msra.mxu0 %v1037
        %1041 = vmatprep.subr.bf16.mxu0 0
        %1042 = vmatpush1.bf16.msra.mxu0 0
        %1043 = vmatprep.subr.bf16.mxu0 0
        %1044 = vmatpush1.bf16.msra.mxu0 0
        %1045 = vmatprep.subr.bf16.mxu0 0
        %1046 = vmatpush1.bf16.msra.mxu0 0
        %1047 = vmatprep.subr.bf16.mxu0 0
        %1048 = vmatpush1.bf16.msra.mxu0 0
        %1049 = vmatprep.subr.bf16.mxu0 0
        %1050 = vmatpush1.bf16.msra.mxu0 0
        %1051 = vmatprep.subr.bf16.mxu0 0
        %1052 = vmatpush1.bf16.msra.mxu0 0
        %1053 = vmatprep.subr.bf16.mxu0 0
        %1054 = vmatpush1.bf16.msra.mxu0 0
        %1055 = vmatprep.subr.bf16.mxu0 0
        %1056 = vmatpush1.bf16.msra.mxu0 0
        %1057 = vmatprep.subr.bf16.mxu0 0
        %1058 = vmatpush1.bf16.msra.mxu0 0
        %1059 = vmatprep.subr.bf16.mxu0 0
        %1060 = vmatpush1.bf16.msra.mxu0 0
        %1061 = vmatprep.subr.bf16.mxu0 0
        %1062 = vmatpush1.bf16.msra.mxu0 0
        %1063 = vmatprep.subr.bf16.mxu0 0
        %1064 = vmatpush1.bf16.msra.mxu0 0
        %1065 = vmatprep.subr.bf16.mxu0 0
        %1066 = vmatpush1.bf16.msra.mxu0 0
        %1067 = vmatprep.subr.bf16.mxu0 0
        %1068 = vmatpush1.bf16.msra.mxu0 0
        %1069 = vmatprep.subr.bf16.mxu0 0
        %1070 = vmatpush1.bf16.msra.mxu0 0
        %1071 = vmatprep.mubr.bf16.mxu0 0
        %1072 = vmatmul.mubr.bf16.gmra.mrb[0].mxu0 %v1031
        %v1073 = vpop.f32.mrb[0].mxu0
        %v1074 = vadd.f32 0.0, %v1073
        %v1075 = vpop.f32.mrb[0].mxu0
        %v1076 = vpop.f32.mrb[0].mxu0
        %v1077 = vadd.f32 0.0, %v1076
        %v1078 = vpop.f32.mrb[0].mxu0
        %1079 = vmatprep.mubr.bf16.mxu0 0
        %1080 = vmatmul.mubr.bf16.gmra.mrb[0].mxu0 %v1034
        %v1081 = vpop.f32.mrb[0].mxu0
        %v1082 = vadd.f32 0.0, %v1081
        %v1083 = vpop.f32.mrb[0].mxu0
        %v1084 = vpop.f32.mrb[0].mxu0
        %v1085 = vadd.f32 0.0, %v1084
        %v1086 = vpop.f32.mrb[0].mxu0
        %1087 = vdwg.mxu0
        %v1088 = vsub.f32 0.0, %v1074
        %v1089 = vsub.f32 0.0, %v1077
        %v1090 = vsub.f32 0.0, %v1082
        %v1091 = vsub.f32 0.0, %v1085
        %v1092 = vmul.f32 %v1088, 1.442695
        %v1093 = vpow.pop %v1092
        %v1094 = vmul.f32 %v1089, 1.442695
        %v1095 = vpow.pop %v1094
        %v1096 = vmul.f32 %v1090, 1.442695
        %v1097 = vpow.pop %v1096
        %v1098 = vmul.f32 %v1091, 1.442695
        %v1099 = vpow.pop %v1098
        %v1100 = vadd.f32 %v1093, 1.0
        %v1101 = vadd.f32 %v1095, 1.0
        %v1102 = vadd.f32 %v1097, 1.0
        %v1103 = vadd.f32 %v1099, 1.0
        %v1104 = vrcp.pop %v1100
        %v1105 = vrcp.pop %v1101
        %v1106 = vrcp.pop %v1102
        %v1107 = vrcp.pop %v1103
        %v1108 = vld [vmem:[%s5] sm:$0xf]
        %v1110 = vsel %vm907, %v904, 0
        %v1113 = vsel %vm907, %v905, 0
        %v1116 = vsel %vm920, %v1108, 0
        %1118 = vmatprep.subr.bf16.mxu0 0
        %1119 = vmatpush1.bf16.msra.mxu0 %v1116
        %1120 = vmatprep.subr.bf16.mxu0 0
        %1121 = vmatpush1.bf16.msra.mxu0 0
        %1122 = vmatprep.subr.bf16.mxu0 0
        %1123 = vmatpush1.bf16.msra.mxu0 0
        %1124 = vmatprep.subr.bf16.mxu0 0
        %1125 = vmatpush1.bf16.msra.mxu0 0
        %1126 = vmatprep.subr.bf16.mxu0 0
        %1127 = vmatpush1.bf16.msra.mxu0 0
        %1128 = vmatprep.subr.bf16.mxu0 0
        %1129 = vmatpush1.bf16.msra.mxu0 0
        %1130 = vmatprep.subr.bf16.mxu0 0
        %1131 = vmatpush1.bf16.msra.mxu0 0
        %1132 = vmatprep.subr.bf16.mxu0 0
        %1133 = vmatpush1.bf16.msra.mxu0 0
        %1134 = vmatprep.subr.bf16.mxu0 0
        %1135 = vmatpush1.bf16.msra.mxu0 0
        %1136 = vmatprep.subr.bf16.mxu0 0
        %1137 = vmatpush1.bf16.msra.mxu0 0
        %1138 = vmatprep.subr.bf16.mxu0 0
        %1139 = vmatpush1.bf16.msra.mxu0 0
        %1140 = vmatprep.subr.bf16.mxu0 0
        %1141 = vmatpush1.bf16.msra.mxu0 0
        %1142 = vmatprep.subr.bf16.mxu0 0
        %1143 = vmatpush1.bf16.msra.mxu0 0
        %1144 = vmatprep.subr.bf16.mxu0 0
        %1145 = vmatpush1.bf16.msra.mxu0 0
        %1146 = vmatprep.subr.bf16.mxu0 0
        %1147 = vmatpush1.bf16.msra.mxu0 0
        %1148 = vmatprep.subr.bf16.mxu0 0
        %1149 = vmatpush1.bf16.msra.mxu0 0
        %1150 = vmatprep.mubr.bf16.mxu0 0
        %1151 = vmatmul.mubr.bf16.gmra.mrb[0].mxu0 %v1110
        %v1152 = vpop.f32.mrb[0].mxu0
        %v1153 = vadd.f32 0.0, %v1152
        %v1154 = vpop.f32.mrb[0].mxu0
        %v1155 = vpop.f32.mrb[0].mxu0
        %v1156 = vadd.f32 0.0, %v1155
        %v1157 = vpop.f32.mrb[0].mxu0
        %1158 = vmatprep.mubr.bf16.mxu0 0
        %1159 = vmatmul.mubr.bf16.gmra.mrb[0].mxu0 %v1113
        %v1160 = vpop.f32.mrb[0].mxu0
        %v1161 = vadd.f32 0.0, %v1160
        %v1162 = vpop.f32.mrb[0].mxu0
        %v1163 = vpop.f32.mrb[0].mxu0
        %v1164 = vadd.f32 0.0, %v1163
        %v1165 = vpop.f32.mrb[0].mxu0
        %1166 = vdwg.mxu0
        %v1167 = vsub.f32 0.0, %v1153
        %v1168 = vsub.f32 0.0, %v1156
        %v1169 = vsub.f32 0.0, %v1161
        %v1170 = vsub.f32 0.0, %v1164
        %v1171 = vmul.f32 %v1167, 1.442695
        %v1172 = vpow.pop %v1171
        %v1173 = vmul.f32 %v1168, 1.442695
        %v1174 = vpow.pop %v1173
        %v1175 = vmul.f32 %v1169, 1.442695
        %v1176 = vpow.pop %v1175
        %v1177 = vmul.f32 %v1170, 1.442695
        %v1178 = vpow.pop %v1177
        %v1179 = vadd.f32 %v1172, 1.0
        %v1180 = vadd.f32 %v1174, 1.0
        %v1181 = vadd.f32 %v1176, 1.0
        %v1182 = vadd.f32 %v1178, 1.0
        %v1183 = vrcp.pop %v1179
        %v1184 = vrcp.pop %v1180
        %v1185 = vrcp.pop %v1181
        %v1186 = vrcp.pop %v1182
        %v1187 = vlaneseq
        %v1188 = vshrl.u32 %v1187, 7
        %v1189 = vsub.s32 0, %v1188
        %v1190 = vrot.slane %v1104, %v1189
        %v1191 = vlaneseq
        %v1192 = vshrl.u32 %v1191, 7
        %v1193 = vsub.s32 1, %v1192
        %v1194 = vrot.slane %v1104, %v1193
        %v1195 = vlaneseq
        %v1196 = vshrl.u32 %v1195, 7
        %v1197 = vsub.s32 2, %v1196
        %v1198 = vrot.slane %v1104, %v1197
        %v1199 = vlaneseq
        %v1200 = vshrl.u32 %v1199, 7
        %v1201 = vsub.s32 3, %v1200
        %v1202 = vrot.slane %v1104, %v1201
        %v1203 = vlaneseq
        %v1204 = vshrl.u32 %v1203, 7
        %v1205 = vsub.s32 4, %v1204
        %v1206 = vrot.slane %v1104, %v1205
        %v1207 = vlaneseq
        %v1208 = vshrl.u32 %v1207, 7
        %v1209 = vsub.s32 5, %v1208
        %v1210 = vrot.slane %v1104, %v1209
        %v1211 = vlaneseq
        %v1212 = vshrl.u32 %v1211, 7
        %v1213 = vsub.s32 6, %v1212
        %v1214 = vrot.slane %v1104, %v1213
        %v1215 = vlaneseq
        %v1216 = vshrl.u32 %v1215, 7
        %v1217 = vsub.s32 7, %v1216
        %v1218 = vrot.slane %v1104, %v1217
        %v1219 = vmul.f32 %v279, %v1021
        %v1220 = vmul.f32 %v280, %v1022
        %v1221 = vmul.f32 %v281, %v1023
        %v1222 = vmul.f32 %v282, %v1024
        %v1223 = vmul.f32 %v283, %v1025
        %v1224 = vmul.f32 %v284, %v1026
        %v1225 = vmul.f32 %v285, %v1027
        %v1226 = vmul.f32 %v286, %v1028
        %v1227 = vmul.f32 %v1219, %v1190
        %v1228 = vmul.f32 %v1220, %v1194
        %v1229 = vmul.f32 %v1221, %v1198
        %v1230 = vmul.f32 %v1222, %v1202
        %v1231 = vmul.f32 %v1223, %v1206
        %v1232 = vmul.f32 %v1224, %v1210
        %v1233 = vmul.f32 %v1225, %v1214
        %v1234 = vmul.f32 %v1226, %v1218
        %v1235 = vmul.f32 %v1227, %v1183
        %v1236 = vmul.f32 %v1228, %v1183
        %v1237 = vmul.f32 %v1229, %v1183
        %v1238 = vmul.f32 %v1230, %v1183
        %v1239 = vmul.f32 %v1231, %v1183
        %v1240 = vmul.f32 %v1232, %v1183
        %v1241 = vmul.f32 %v1233, %v1183
        %v1242 = vmul.f32 %v1234, %v1183
        %v1243 = vpack.c.bf16 %v1236, %v1235
        %v1244 = vpack.c.bf16 %v1238, %v1237
        %v1245 = vpack.c.bf16 %v1240, %v1239
        %v1246 = vpack.c.bf16 %v1242, %v1241
        %v1251 = vunpack.c.l.b16 %v1243
        %v1252 = vunpack.c.h.b16 %v1243
        %v1253 = vunpack.c.l.b16 %v1244
        %v1254 = vunpack.c.h.b16 %v1244
        %v1255 = vunpack.c.l.b16 %v1245
        %v1256 = vunpack.c.h.b16 %v1245
        %v1257 = vunpack.c.l.b16 %v1246
        %v1258 = vunpack.c.h.b16 %v1246
        %v1259 = vpack.c.b16 %v1251, %v1251
        %v1260 = vpack.c.b16 %v1252, %v1252
        %v1261 = vpack.c.b16 %v1253, %v1253
        %v1262 = vpack.c.b16 %v1254, %v1254
        %v1263 = vpack.c.b16 %v1255, %v1255
        %v1264 = vpack.c.b16 %v1256, %v1256
        %v1265 = vpack.c.b16 %v1257, %v1257
        %v1266 = vpack.c.b16 %v1258, %v1258
        %1275 = vst [vmem:[%s269] sm:$0xf] %v1259
        %1276 = vst [vmem:[%s269 + $0x4] sm:$0xf] %v1260
        %1277 = vst [vmem:[%s269 + $0x8] sm:$0xf] %v1261
        %1278 = vst [vmem:[%s269 + $0xc] sm:$0xf] %v1262
        %1279 = vst [vmem:[%s269 + $0x10] sm:$0xf] %v1263
        %1280 = vst [vmem:[%s269 + $0x14] sm:$0xf] %v1264
        %1281 = vst [vmem:[%s269 + $0x18] sm:$0xf] %v1265
        %1282 = vst [vmem:[%s269 + $0x1c] sm:$0xf] %v1266
        %v1283 = vld [vmem:[%s360] sm:$0xf]
        %v1284 = vld [vmem:[%s360 + $0x4] sm:$0xf]
        %v1285 = vld [vmem:[%s360 + $0x8] sm:$0xf]
        %v1286 = vld [vmem:[%s360 + $0xc] sm:$0xf]
        %v1287 = vld [vmem:[%s360 + $0x10] sm:$0xf]
        %v1288 = vld [vmem:[%s360 + $0x14] sm:$0xf]
        %v1289 = vld [vmem:[%s360 + $0x18] sm:$0xf]
        %v1290 = vld [vmem:[%s360 + $0x1c] sm:$0xf]
        %v1291 = vlaneseq
        %v1292 = vshrl.u32 %v1291, 7
        %v1293 = vsub.s32 0, %v1292
        %v1294 = vrot.slane %v1105, %v1293
        %v1295 = vlaneseq
        %v1296 = vshrl.u32 %v1295, 7
        %v1297 = vsub.s32 1, %v1296
        %v1298 = vrot.slane %v1105, %v1297
        %v1299 = vlaneseq
        %v1300 = vshrl.u32 %v1299, 7
        %v1301 = vsub.s32 2, %v1300
        %v1302 = vrot.slane %v1105, %v1301
        %v1303 = vlaneseq
        %v1304 = vshrl.u32 %v1303, 7
        %v1305 = vsub.s32 3, %v1304
        %v1306 = vrot.slane %v1105, %v1305
        %v1307 = vlaneseq
        %v1308 = vshrl.u32 %v1307, 7
        %v1309 = vsub.s32 4, %v1308
        %v1310 = vrot.slane %v1105, %v1309
        %v1311 = vlaneseq
        %v1312 = vshrl.u32 %v1311, 7
        %v1313 = vsub.s32 5, %v1312
        %v1314 = vrot.slane %v1105, %v1313
        %v1315 = vlaneseq
        %v1316 = vshrl.u32 %v1315, 7
        %v1317 = vsub.s32 6, %v1316
        %v1318 = vrot.slane %v1105, %v1317
        %v1319 = vlaneseq
        %v1320 = vshrl.u32 %v1319, 7
        %v1321 = vsub.s32 7, %v1320
        %v1322 = vrot.slane %v1105, %v1321
        %v1323 = vunpack.c.l.bf16 %v1283
        %v1324 = vunpack.c.l.bf16 %v1284
        %v1325 = vunpack.c.l.bf16 %v1285
        %v1326 = vunpack.c.l.bf16 %v1286
        %v1327 = vunpack.c.l.bf16 %v1287
        %v1328 = vunpack.c.l.bf16 %v1288
        %v1329 = vunpack.c.l.bf16 %v1289
        %v1330 = vunpack.c.l.bf16 %v1290
        %v1331 = vmul.f32 %v1323, %v1021
        %v1332 = vmul.f32 %v1324, %v1022
        %v1333 = vmul.f32 %v1325, %v1023
        %v1334 = vmul.f32 %v1326, %v1024
        %v1335 = vmul.f32 %v1327, %v1025
        %v1336 = vmul.f32 %v1328, %v1026
        %v1337 = vmul.f32 %v1329, %v1027
        %v1338 = vmul.f32 %v1330, %v1028
        %v1339 = vmul.f32 %v1331, %v1294
        %v1340 = vmul.f32 %v1332, %v1298
        %v1341 = vmul.f32 %v1333, %v1302
        %v1342 = vmul.f32 %v1334, %v1306
        %v1343 = vmul.f32 %v1335, %v1310
        %v1344 = vmul.f32 %v1336, %v1314
        %v1345 = vmul.f32 %v1337, %v1318
        %v1346 = vmul.f32 %v1338, %v1322
        %v1347 = vmul.f32 %v1339, %v1184
        %v1348 = vmul.f32 %v1340, %v1184
        %v1349 = vmul.f32 %v1341, %v1184
        %v1350 = vmul.f32 %v1342, %v1184
        %v1351 = vmul.f32 %v1343, %v1184
        %v1352 = vmul.f32 %v1344, %v1184
        %v1353 = vmul.f32 %v1345, %v1184
        %v1354 = vmul.f32 %v1346, %v1184
        %v1355 = vpack.c.bf16 %v1348, %v1347
        %v1356 = vpack.c.bf16 %v1350, %v1349
        %v1357 = vpack.c.bf16 %v1352, %v1351
        %v1358 = vpack.c.bf16 %v1354, %v1353
        %v1363 = vunpack.c.l.b16 %v1355
        %v1364 = vunpack.c.h.b16 %v1355
        %v1365 = vunpack.c.l.b16 %v1356
        %v1366 = vunpack.c.h.b16 %v1356
        %v1367 = vunpack.c.l.b16 %v1357
        %v1368 = vunpack.c.h.b16 %v1357
        %v1369 = vunpack.c.l.b16 %v1358
        %v1370 = vunpack.c.h.b16 %v1358
        %v1371 = vpack.c.b16 %v1363, %v1363
        %v1372 = vpack.c.b16 %v1364, %v1364
        %v1373 = vpack.c.b16 %v1365, %v1365
        %v1374 = vpack.c.b16 %v1366, %v1366
        %v1375 = vpack.c.b16 %v1367, %v1367
        %v1376 = vpack.c.b16 %v1368, %v1368
        %v1377 = vpack.c.b16 %v1369, %v1369
        %v1378 = vpack.c.b16 %v1370, %v1370
        %s1387 = scalar_lea.vmem %s269, 32 [#allocation5]
        %1388 = vst [vmem:[%s1387] sm:$0xf] %v1371
        %1389 = vst [vmem:[%s1387 + $0x4] sm:$0xf] %v1372
        %1390 = vst [vmem:[%s1387 + $0x8] sm:$0xf] %v1373
        %1391 = vst [vmem:[%s1387 + $0xc] sm:$0xf] %v1374
        %1392 = vst [vmem:[%s1387 + $0x10] sm:$0xf] %v1375
        %1393 = vst [vmem:[%s1387 + $0x14] sm:$0xf] %v1376
        %1394 = vst [vmem:[%s1387 + $0x18] sm:$0xf] %v1377
        %1395 = vst [vmem:[%s1387 + $0x1c] sm:$0xf] %v1378
        %v1396 = vld [vmem:[%s449] sm:$0xf]
        %v1397 = vld [vmem:[%s449 + $0x4] sm:$0xf]
        %v1398 = vld [vmem:[%s449 + $0x8] sm:$0xf]
        %v1399 = vld [vmem:[%s449 + $0xc] sm:$0xf]
        %v1400 = vld [vmem:[%s449 + $0x10] sm:$0xf]
        %v1401 = vld [vmem:[%s449 + $0x14] sm:$0xf]
        %v1402 = vld [vmem:[%s449 + $0x18] sm:$0xf]
        %v1403 = vld [vmem:[%s449 + $0x1c] sm:$0xf]
        %v1404 = vlaneseq
        %v1405 = vshrl.u32 %v1404, 7
        %v1406 = vsub.s32 0, %v1405
        %v1407 = vrot.slane %v1106, %v1406
        %v1408 = vlaneseq
        %v1409 = vshrl.u32 %v1408, 7
        %v1410 = vsub.s32 1, %v1409
        %v1411 = vrot.slane %v1106, %v1410
        %v1412 = vlaneseq
        %v1413 = vshrl.u32 %v1412, 7
        %v1414 = vsub.s32 2, %v1413
        %v1415 = vrot.slane %v1106, %v1414
        %v1416 = vlaneseq
        %v1417 = vshrl.u32 %v1416, 7
        %v1418 = vsub.s32 3, %v1417
        %v1419 = vrot.slane %v1106, %v1418
        %v1420 = vlaneseq
        %v1421 = vshrl.u32 %v1420, 7
        %v1422 = vsub.s32 4, %v1421
        %v1423 = vrot.slane %v1106, %v1422
        %v1424 = vlaneseq
        %v1425 = vshrl.u32 %v1424, 7
        %v1426 = vsub.s32 5, %v1425
        %v1427 = vrot.slane %v1106, %v1426
        %v1428 = vlaneseq
        %v1429 = vshrl.u32 %v1428, 7
        %v1430 = vsub.s32 6, %v1429
        %v1431 = vrot.slane %v1106, %v1430
        %v1432 = vlaneseq
        %v1433 = vshrl.u32 %v1432, 7
        %v1434 = vsub.s32 7, %v1433
        %v1435 = vrot.slane %v1106, %v1434
        %v1436 = vunpack.c.l.bf16 %v1396
        %v1437 = vunpack.c.l.bf16 %v1397
        %v1438 = vunpack.c.l.bf16 %v1398
        %v1439 = vunpack.c.l.bf16 %v1399
        %v1440 = vunpack.c.l.bf16 %v1400
        %v1441 = vunpack.c.l.bf16 %v1401
        %v1442 = vunpack.c.l.bf16 %v1402
        %v1443 = vunpack.c.l.bf16 %v1403
        %v1444 = vmul.f32 %v1436, %v1021
        %v1445 = vmul.f32 %v1437, %v1022
        %v1446 = vmul.f32 %v1438, %v1023
        %v1447 = vmul.f32 %v1439, %v1024
        %v1448 = vmul.f32 %v1440, %v1025
        %v1449 = vmul.f32 %v1441, %v1026
        %v1450 = vmul.f32 %v1442, %v1027
        %v1451 = vmul.f32 %v1443, %v1028
        %v1452 = vmul.f32 %v1444, %v1407
        %v1453 = vmul.f32 %v1445, %v1411
        %v1454 = vmul.f32 %v1446, %v1415
        %v1455 = vmul.f32 %v1447, %v1419
        %v1456 = vmul.f32 %v1448, %v1423
        %v1457 = vmul.f32 %v1449, %v1427
        %v1458 = vmul.f32 %v1450, %v1431
        %v1459 = vmul.f32 %v1451, %v1435
        %v1460 = vmul.f32 %v1452, %v1185
        %v1461 = vmul.f32 %v1453, %v1185
        %v1462 = vmul.f32 %v1454, %v1185
        %v1463 = vmul.f32 %v1455, %v1185
        %v1464 = vmul.f32 %v1456, %v1185
        %v1465 = vmul.f32 %v1457, %v1185
        %v1466 = vmul.f32 %v1458, %v1185
        %v1467 = vmul.f32 %v1459, %v1185
        %v1468 = vpack.c.bf16 %v1461, %v1460
        %v1469 = vpack.c.bf16 %v1463, %v1462
        %v1470 = vpack.c.bf16 %v1465, %v1464
        %v1471 = vpack.c.bf16 %v1467, %v1466
        %v1476 = vunpack.c.l.b16 %v1468
        %v1477 = vunpack.c.h.b16 %v1468
        %v1478 = vunpack.c.l.b16 %v1469
        %v1479 = vunpack.c.h.b16 %v1469
        %v1480 = vunpack.c.l.b16 %v1470
        %v1481 = vunpack.c.h.b16 %v1470
        %v1482 = vunpack.c.l.b16 %v1471
        %v1483 = vunpack.c.h.b16 %v1471
        %v1484 = vpack.c.b16 %v1476, %v1476
        %v1485 = vpack.c.b16 %v1477, %v1477
        %v1486 = vpack.c.b16 %v1478, %v1478
        %v1487 = vpack.c.b16 %v1479, %v1479
        %v1488 = vpack.c.b16 %v1480, %v1480
        %v1489 = vpack.c.b16 %v1481, %v1481
        %v1490 = vpack.c.b16 %v1482, %v1482
        %v1491 = vpack.c.b16 %v1483, %v1483
        %s1500 = scalar_lea.vmem %s269, 64 [#allocation5]
        %1501 = vst [vmem:[%s1500] sm:$0xf] %v1484
        %1502 = vst [vmem:[%s1500 + $0x4] sm:$0xf] %v1485
        %1503 = vst [vmem:[%s1500 + $0x8] sm:$0xf] %v1486
        %1504 = vst [vmem:[%s1500 + $0xc] sm:$0xf] %v1487
        %1505 = vst [vmem:[%s1500 + $0x10] sm:$0xf] %v1488
        %1506 = vst [vmem:[%s1500 + $0x14] sm:$0xf] %v1489
        %1507 = vst [vmem:[%s1500 + $0x18] sm:$0xf] %v1490
        %1508 = vst [vmem:[%s1500 + $0x1c] sm:$0xf] %v1491
        %v1509 = vld [vmem:[%s538] sm:$0xf]
        %v1510 = vld [vmem:[%s538 + $0x4] sm:$0xf]
        %v1511 = vld [vmem:[%s538 + $0x8] sm:$0xf]
        %v1512 = vld [vmem:[%s538 + $0xc] sm:$0xf]
        %v1513 = vld [vmem:[%s538 + $0x10] sm:$0xf]
        %v1514 = vld [vmem:[%s538 + $0x14] sm:$0xf]
        %v1515 = vld [vmem:[%s538 + $0x18] sm:$0xf]
        %v1516 = vld [vmem:[%s538 + $0x1c] sm:$0xf]
        %v1517 = vlaneseq
        %v1518 = vshrl.u32 %v1517, 7
        %v1519 = vsub.s32 0, %v1518
        %v1520 = vrot.slane %v1107, %v1519
        %v1521 = vlaneseq
        %v1522 = vshrl.u32 %v1521, 7
        %v1523 = vsub.s32 1, %v1522
        %v1524 = vrot.slane %v1107, %v1523
        %v1525 = vlaneseq
        %v1526 = vshrl.u32 %v1525, 7
        %v1527 = vsub.s32 2, %v1526
        %v1528 = vrot.slane %v1107, %v1527
        %v1529 = vlaneseq
        %v1530 = vshrl.u32 %v1529, 7
        %v1531 = vsub.s32 3, %v1530
        %v1532 = vrot.slane %v1107, %v1531
        %v1533 = vlaneseq
        %v1534 = vshrl.u32 %v1533, 7
        %v1535 = vsub.s32 4, %v1534
        %v1536 = vrot.slane %v1107, %v1535
        %v1537 = vlaneseq
        %v1538 = vshrl.u32 %v1537, 7
        %v1539 = vsub.s32 5, %v1538
        %v1540 = vrot.slane %v1107, %v1539
        %v1541 = vlaneseq
        %v1542 = vshrl.u32 %v1541, 7
        %v1543 = vsub.s32 6, %v1542
        %v1544 = vrot.slane %v1107, %v1543
        %v1545 = vlaneseq
        %v1546 = vshrl.u32 %v1545, 7
        %v1547 = vsub.s32 7, %v1546
        %v1548 = vrot.slane %v1107, %v1547
        %v1549 = vunpack.c.l.bf16 %v1509
        %v1550 = vunpack.c.l.bf16 %v1510
        %v1551 = vunpack.c.l.bf16 %v1511
        %v1552 = vunpack.c.l.bf16 %v1512
        %v1553 = vunpack.c.l.bf16 %v1513
        %v1554 = vunpack.c.l.bf16 %v1514
        %v1555 = vunpack.c.l.bf16 %v1515
        %v1556 = vunpack.c.l.bf16 %v1516
        %v1557 = vmul.f32 %v1549, %v1021
        %v1558 = vmul.f32 %v1550, %v1022
        %v1559 = vmul.f32 %v1551, %v1023
        %v1560 = vmul.f32 %v1552, %v1024
        %v1561 = vmul.f32 %v1553, %v1025
        %v1562 = vmul.f32 %v1554, %v1026
        %v1563 = vmul.f32 %v1555, %v1027
        %v1564 = vmul.f32 %v1556, %v1028
        %v1565 = vmul.f32 %v1557, %v1520
        %v1566 = vmul.f32 %v1558, %v1524
        %v1567 = vmul.f32 %v1559, %v1528
        %v1568 = vmul.f32 %v1560, %v1532
        %v1569 = vmul.f32 %v1561, %v1536
        %v1570 = vmul.f32 %v1562, %v1540
        %v1571 = vmul.f32 %v1563, %v1544
        %v1572 = vmul.f32 %v1564, %v1548
        %v1573 = vmul.f32 %v1565, %v1186
        %v1574 = vmul.f32 %v1566, %v1186
        %v1575 = vmul.f32 %v1567, %v1186
        %v1576 = vmul.f32 %v1568, %v1186
        %v1577 = vmul.f32 %v1569, %v1186
        %v1578 = vmul.f32 %v1570, %v1186
        %v1579 = vmul.f32 %v1571, %v1186
        %v1580 = vmul.f32 %v1572, %v1186
        %v1581 = vpack.c.bf16 %v1574, %v1573
        %v1582 = vpack.c.bf16 %v1576, %v1575
        %v1583 = vpack.c.bf16 %v1578, %v1577
        %v1584 = vpack.c.bf16 %v1580, %v1579
        %v1589 = vunpack.c.l.b16 %v1581
        %v1590 = vunpack.c.h.b16 %v1581
        %v1591 = vunpack.c.l.b16 %v1582
        %v1592 = vunpack.c.h.b16 %v1582
        %v1593 = vunpack.c.l.b16 %v1583
        %v1594 = vunpack.c.h.b16 %v1583
        %v1595 = vunpack.c.l.b16 %v1584
        %v1596 = vunpack.c.h.b16 %v1584
        %v1597 = vpack.c.b16 %v1589, %v1589
        %v1598 = vpack.c.b16 %v1590, %v1590
        %v1599 = vpack.c.b16 %v1591, %v1591
        %v1600 = vpack.c.b16 %v1592, %v1592
        %v1601 = vpack.c.b16 %v1593, %v1593
        %v1602 = vpack.c.b16 %v1594, %v1594
        %v1603 = vpack.c.b16 %v1595, %v1595
        %v1604 = vpack.c.b16 %v1596, %v1596
        %s1613 = scalar_lea.vmem %s269, 96 [#allocation5]
        %1614 = vst [vmem:[%s1613] sm:$0xf] %v1597
        %1615 = vst [vmem:[%s1613 + $0x4] sm:$0xf] %v1598
        %1616 = vst [vmem:[%s1613 + $0x8] sm:$0xf] %v1599
        %1617 = vst [vmem:[%s1613 + $0xc] sm:$0xf] %v1600
        %1618 = vst [vmem:[%s1613 + $0x10] sm:$0xf] %v1601
        %1619 = vst [vmem:[%s1613 + $0x14] sm:$0xf] %v1602
        %1620 = vst [vmem:[%s1613 + $0x18] sm:$0xf] %v1603
        %1621 = vst [vmem:[%s1613 + $0x1c] sm:$0xf] %v1604
        %s1622 = sand.u32 %s162, 1
        %s1623 = scalar_lea.sflag [#allocation4], %s1622
        %s1624 = sand.u32 %s162, 1
        %s1625 = smul.addr %s1624, 128
        %s1626 = scalar_lea.vmem [#allocation5], %s1625
        // Predicated region
        $region49: #{ca_block_forward_ndhwc.1} parent=43 // pred_check
          %p1627 = pneg %p172
        $region50: #{ca_block_forward_ndhwc.1} parent=43 // pred_check_branch
          %1629 = sbr.rel (%p1627) target = $region52
        $region51: #{ca_block_forward_ndhwc.1} parent=43 // pred_region
          %s1631 = ssub.s32 2048, 2048
          %1632 = vsyncadd %s1623, %s1631
          %s1633 = smul.addr %s23, 32
          %s1634 = smul.addr %s1633, 64
          %s1635 = scalar_lea.hbm %s6, %s1634
          %s1636 = sshll.u32 %s1626, 4
          %s1637 = int_to_ptr.vmem [resolvable:$true] %s1636
          %1642 = dma.vmem_to_hbm [thread:$0]  %s1637, 2048, %s1635, %s1623, 64, 64, 4
        $region52: #{ca_block_forward_ndhwc.1} parent=43 // pred_fallthru
          _
      $region44: #{ca_block_forward_ndhwc.1} parent=5 // pred_fallthru
        _
      %p1643 = scmp.le.s32.totalorder 2, %s18
      // Predicated region
      $region53: #{ca_block_forward_ndhwc.1} parent=5 // pred_check
        %p1644 = pneg %p1643
      $region54: #{ca_block_forward_ndhwc.1} parent=5 // pred_check_branch
        %1646 = sbr.rel (%p1644) target = $region56
      $region55: #{ca_block_forward_ndhwc.1} parent=5 // pred_region
        %s1647 = ssub.s32 %s18, 2
        // Predicated region
        $region57: #{ca_block_forward_ndhwc.1} parent=55 // pred_check
          %p1648 = pneg %p178
        $region58: #{ca_block_forward_ndhwc.1} parent=55 // pred_check_branch
          %1650 = sbr.rel (%p1648) target = $region60
        $region59: #{ca_block_forward_ndhwc.1} parent=55 // pred_region
          %s1651 = sand.u32 %s163, 1
          %s1652 = scalar_lea.sflag [#allocation4], %s1651
          %s1653 = sand.u32 %s163, 1
          %s1654 = smul.addr %s1653, 128
          %s1655 = scalar_lea.vmem [#allocation5], %s1654
          %1656 = dma.done %s1652, 2048
        $region60: #{ca_block_forward_ndhwc.1} parent=55 // pred_fallthru
          _
      $region56: #{ca_block_forward_ndhwc.1} parent=5 // pred_fallthru
        _
    $region6: #{ca_block_forward_ndhwc.1} parent=1 // loop_footer
      %s22 = sadd.s32 1, %s18
    $region7: #{ca_block_forward_ndhwc.1} parent=1 // loop_footer_branch
      %17 = sbr.rel target = $region3
    $region8: #{ca_block_forward_ndhwc.1} parent=1 // loop_exit
      _
    %1657 = vsyncpa [#allocation3], 1
    %s1658 = scalar_lea.sflag [#allocation3], 1
    %1659 = vsyncpa %s1658, 1
    %1660 = vsyncpa [#allocation4], 1
    %s1661 = scalar_lea.sflag [#allocation4], 1
    %1662 = vsyncpa %s1661, 1

</llo_original>
